<compile_context>
chip_gen: v5e
topology: v5e:2x2
jax: 0.10.0
libtpu: 0.0.40
codegen_flags: <defaults>
</compile_context>

<pallas_src>
import functools

import jax
import jax.numpy as jnp
from jax import lax
from jax.experimental import pallas as pl
from jax.experimental.pallas import tpu as pltpu

LANE = 128  # lane-dense output width


# ----------------------------------------------------------------------------
# Fused Pallas kernel: whole forward pass in one invocation
# ----------------------------------------------------------------------------

def _fused_gnn_kernel(src_ref, dst_ref, x_ref, emb_w_ref, emb_b_ref,
                      gat_w_ref, gat_as_ref, gat_ad_ref, gat_b_ref,
                      pw1_ref, pb1_ref, pw2_ref, pb2_ref,
                      ew1s_ref, ew1d_ref, eb1_ref, ew2_ref, eb2_ref,
                      node_out_ref, edge_out_ref, graph_out_ref):
    f32 = jnp.float32
    n = x_ref.shape[0]
    e = src_ref.shape[0]
    hidden = emb_w_ref.shape[1]
    num_layers = gat_w_ref.shape[0]
    lane = node_out_ref.shape[1]

    # --- edge structure, built in-kernel (no XLA scatter / HBM mask) --------
    col_en = lax.broadcasted_iota(jnp.int32, (e, n), 1)
    oh_src = (src_ref[...] == col_en).astype(f32)            # (E, N)
    oh_dst = (dst_ref[...] == col_en).astype(f32)            # (E, N)

    # dense adjacency with multiplicity: adj[i, j] = #edges j -> i
    adj = lax.dot_general(oh_dst, oh_src, (((0,), (0,)), ((), ())),
                          preferred_element_type=f32)        # (N, N)
    # GATConv(add_self_loops=True): drop existing self loops, add exactly one.
    row_nn = lax.broadcasted_iota(jnp.int32, (n, n), 0)
    col_nn = lax.broadcasted_iota(jnp.int32, (n, n), 1)
    adj = jnp.where(row_nn == col_nn, 1.0, adj)

    # --- node embedding + ReLU (dropout = identity in eval mode) ------------
    h = jnp.maximum(
        jnp.dot(x_ref[...], emb_w_ref[...], preferred_element_type=f32)
        + emb_b_ref[...], 0.0)                                # (N, H)

    # --- GAT stack, unrolled; h stays resident in VMEM/vregs ----------------
    for l in range(num_layers):
        xw = jnp.dot(h, gat_w_ref[l], preferred_element_type=f32)      # (N, H)
        # alpha_dst[i] = <xw[i], att_dst>, alpha_src[j] = <xw[j], att_src>
        a_dst = lax.dot_general(xw, gat_ad_ref[l], (((1,), (1,)), ((), ())),
                                preferred_element_type=f32)            # (N, 1)
        a_src_row = lax.dot_general(gat_as_ref[l], xw, (((1,), (1,)), ((), ())),
                                    preferred_element_type=f32)        # (1, N)
        s = a_dst + a_src_row                                          # (N, N)
        s = jnp.where(s > 0, s, 0.2 * s)                               # LeakyReLU(0.2)
        s = jnp.where(adj > 0, s, f32(-1e30))                          # mask non-edges
        m = jnp.max(s, axis=-1, keepdims=True)
        p = jnp.exp(s - m) * adj                # multiplicity = PyG duplicate edges
        denom = jnp.sum(p, axis=-1, keepdims=True)
        attn = p * pl.reciprocal(denom, approx=True)                   # EUP slot
        agg = jnp.dot(attn, xw, preferred_element_type=f32) + gat_b_ref[l]
        h = jnp.maximum(h + agg, 0.0)                                  # residual + ReLU

    # --- node head: Linear -> ReLU -> (Dropout=id) -> Linear (lane-padded) --
    z = jnp.maximum(
        jnp.dot(h, pw1_ref[...], preferred_element_type=f32) + pb1_ref[...], 0.0)
    node_out_ref[...] = (
        jnp.dot(z, pw2_ref[...], preferred_element_type=f32) + pb2_ref[...])

    # --- graph embedding: mean over nodes (batch=None branch), lane-padded --
    gmean = jnp.mean(h, axis=0, keepdims=True)                         # (1, H)
    if hidden < lane:
        gmean = jnp.concatenate(
            [gmean, jnp.zeros((1, lane - hidden), f32)], axis=1)
    graph_out_ref[...] = gmean

    # --- edge head: cat([h[src], h[dst]]) @ W1 == h[src]@W1_top + h[dst]@W1_bot
    #     computed once per node, then gathered per edge via one-hot matmuls.
    hw_s = jnp.dot(h, ew1s_ref[...], preferred_element_type=f32)       # (N, H)
    hw_d = jnp.dot(h, ew1d_ref[...], preferred_element_type=f32)       # (N, H)
    ze = jnp.maximum(
        jnp.dot(oh_src, hw_s, preferred_element_type=f32)
        + jnp.dot(oh_dst, hw_d, preferred_element_type=f32)
        + eb1_ref[...], 0.0)                                           # (E, H)
    edge_out_ref[...] = (
        jnp.dot(ze, ew2_ref[...], preferred_element_type=f32) + eb2_ref[...])


# ----------------------------------------------------------------------------
# Parameter init (kernel-ready layout: stacked GAT weights, lane-padded heads)
# ----------------------------------------------------------------------------

def init_params(key, input_dim, hidden_dim, output_dim, num_layers=3):
    assert output_dim <= LANE and hidden_dim <= LANE
    ks = list(jax.random.split(key, 4 + 4 * num_layers + 8))
    it = iter(ks)

    def lin(fan_in, fan_out):
        w = jax.random.normal(next(it), (fan_in, fan_out), jnp.float32) * (fan_in ** -0.5)
        b = jax.random.normal(next(it), (1, fan_out), jnp.float32) * 0.01
        return w, b

    p = {}
    p["emb_w"], p["emb_b"] = lin(input_dim, hidden_dim)

    gw, gas, gad, gb = [], [], [], []
    for _ in range(num_layers):
        gw.append(jax.random.normal(next(it), (hidden_dim, hidden_dim),
                                    jnp.float32) * (hidden_dim ** -0.5))
        gas.append(jax.random.normal(next(it), (1, hidden_dim), jnp.float32) * 0.1)
        gad.append(jax.random.normal(next(it), (1, hidden_dim), jnp.float32) * 0.1)
        gb.append(jax.random.normal(next(it), (1, hidden_dim), jnp.float32) * 0.01)
    p["gat_w"] = jnp.stack(gw)        # (L, H, H)
    p["gat_a_src"] = jnp.stack(gas)   # (L, 1, H)
    p["gat_a_dst"] = jnp.stack(gad)   # (L, 1, H)
    p["gat_b"] = jnp.stack(gb)        # (L, 1, H)

    # process_mlp: Linear(H,H) -> ReLU -> Dropout -> Linear(H,output_dim)
    p["proc_w1"], p["proc_b1"] = lin(hidden_dim, hidden_dim)
    w2, b2 = lin(hidden_dim, output_dim)
    # zero-pad final columns to 128 lanes (lane-dense unmasked stores);
    # logically identical to Linear(H, output_dim).
    p["proc_w2p"] = jnp.pad(w2, ((0, 0), (0, LANE - output_dim)))
    p["proc_b2p"] = jnp.pad(b2, ((0, 0), (0, LANE - output_dim)))

    # edge_mlp: Linear(2H,H) -> ReLU -> Dropout -> Linear(H,3)
    ew1, eb1 = lin(2 * hidden_dim, hidden_dim)
    p["edge_w1_src"] = ew1[:hidden_dim]   # multiplies h[src]  (first half of concat)
    p["edge_w1_dst"] = ew1[hidden_dim:]   # multiplies h[dst]  (second half of concat)
    p["edge_b1"] = eb1
    ew2, eb2 = lin(hidden_dim, 3)
    p["edge_w2p"] = jnp.pad(ew2, ((0, 0), (0, LANE - 3)))
    p["edge_b2p"] = jnp.pad(eb2, ((0, 0), (0, LANE - 3)))
    return p


# ----------------------------------------------------------------------------
# Forward wrapper: one pallas_call, no grid, whole arrays resident in VMEM
# ----------------------------------------------------------------------------

@functools.partial(jax.jit, static_argnames=("output_dim",))
def process_mapping_gnn_forward(params, x, edge_index, *, output_dim):
    n = x.shape[0]
    e = edge_index.shape[1]
    hidden = params["emb_w"].shape[1]

    src_col = edge_index[0].astype(jnp.int32).reshape(e, 1)
    dst_col = edge_index[1].astype(jnp.int32).reshape(e, 1)

    inputs = (src_col, dst_col, x,
              params["emb_w"], params["emb_b"],
              params["gat_w"], params["gat_a_src"], params["gat_a_dst"],
              params["gat_b"],
              params["proc_w1"], params["proc_b1"],
              params["proc_w2p"], params["proc_b2p"],
              params["edge_w1_src"], params["edge_w1_dst"], params["edge_b1"],
              params["edge_w2p"], params["edge_b2p"])

    vmem = lambda: pl.BlockSpec(memory_space=pltpu.MemorySpace.VMEM)

    node_out, edge_out, graph_out = pl.pallas_call(
        _fused_gnn_kernel,
        out_shape=(jax.ShapeDtypeStruct((n, LANE), jnp.float32),
                   jax.ShapeDtypeStruct((e, LANE), jnp.float32),
                   jax.ShapeDtypeStruct((1, LANE), jnp.float32)),
        in_specs=[vmem() for _ in inputs],
        out_specs=(vmem(), vmem(), vmem()),
    )(*inputs)

    node_pred = node_out[:, :output_dim]
    edge_pred = edge_out[:, :3]
    graph_emb = graph_out[:, :hidden]
    return node_pred, edge_pred, graph_emb


# ----------------------------------------------------------------------------
# Demo
# ----------------------------------------------------------------------------

if __name__ == "__main__":
    INPUT_DIM, HIDDEN_DIM, OUTPUT_DIM, NUM_LAYERS = 16, 32, 8, 3
    N_NODES = 8

    key = jax.random.PRNGKey(0)
    k_params, k_x = jax.random.split(key)

    params = init_params(k_params, INPUT_DIM, HIDDEN_DIM, OUTPUT_DIM, NUM_LAYERS)
    x = jax.random.normal(k_x, (N_NODES, INPUT_DIM), jnp.float32)

    # 12 directed edges (ring + chords), no self loops (GATConv adds its own).
    src = jnp.array([0, 1, 2, 3, 4, 5, 6, 7, 0, 2, 1, 3], jnp.int32)
    dst = jnp.array([1, 2, 3, 4, 5, 6, 7, 0, 4, 6, 5, 7], jnp.int32)
    edge_index = jnp.stack([src, dst], axis=0)

    node_pred, edge_pred, graph_emb = process_mapping_gnn_forward(
        params, x, edge_index, output_dim=OUTPUT_DIM)
    jax.block_until_ready((node_pred, edge_pred, graph_emb))

    assert node_pred.shape == (N_NODES, OUTPUT_DIM)
    assert edge_pred.shape == (edge_index.shape[1], 3)
    assert graph_emb.shape == (1, HIDDEN_DIM)
    assert bool(jnp.all(jnp.isfinite(node_pred)))
    assert bool(jnp.all(jnp.isfinite(edge_pred)))
    assert bool(jnp.all(jnp.isfinite(graph_emb)))
    print("KERNEL_OK")
</pallas_src>

<mosaic_0001>
module attributes {stable_mosaic.version = 11 : i64} {
  func.func @_fused_gnn_kernel(%arg0: memref<12x1xi32, #tpu.memory_space<vmem>>, %arg1: memref<12x1xi32, #tpu.memory_space<vmem>>, %arg2: memref<8x16xf32, #tpu.memory_space<vmem>>, %arg3: memref<16x32xf32, #tpu.memory_space<vmem>>, %arg4: memref<1x32xf32, #tpu.memory_space<vmem>>, %arg5: memref<3x32x32xf32, #tpu.memory_space<vmem>>, %arg6: memref<3x1x32xf32, #tpu.memory_space<vmem>>, %arg7: memref<3x1x32xf32, #tpu.memory_space<vmem>>, %arg8: memref<3x1x32xf32, #tpu.memory_space<vmem>>, %arg9: memref<32x32xf32, #tpu.memory_space<vmem>>, %arg10: memref<1x32xf32, #tpu.memory_space<vmem>>, %arg11: memref<32x128xf32, #tpu.memory_space<vmem>>, %arg12: memref<1x128xf32, #tpu.memory_space<vmem>>, %arg13: memref<32x32xf32, #tpu.memory_space<vmem>>, %arg14: memref<32x32xf32, #tpu.memory_space<vmem>>, %arg15: memref<1x32xf32, #tpu.memory_space<vmem>>, %arg16: memref<32x128xf32, #tpu.memory_space<vmem>>, %arg17: memref<1x128xf32, #tpu.memory_space<vmem>>, %arg18: memref<8x128xf32, #tpu.memory_space<vmem>>, %arg19: memref<12x128xf32, #tpu.memory_space<vmem>>, %arg20: memref<1x128xf32, #tpu.memory_space<vmem>>) attributes {dimension_semantics = [], scalar_prefetch = 0 : i64, scratch_operands = 0 : i64, tpu.core_type = #tpu.core_type<tc>} {
    %0 = tpu.iota {dimensions = array<i32: 1>} : vector<12x8xi32>
    %c0 = arith.constant 0 : index
    %c0_0 = arith.constant 0 : index
    %1 = vector.load %arg0[%c0, %c0_0] : memref<12x1xi32, #tpu.memory_space<vmem>>, vector<12x1xi32>
    %2 = vector.broadcast %1 : vector<12x1xi32> to vector<12x8xi32>
    %3 = arith.cmpi eq, %2, %0 : vector<12x8xi32>
    %4 = arith.extui %3 : vector<12x8xi1> to vector<12x8xi32>
    %5 = arith.sitofp %4 : vector<12x8xi32> to vector<12x8xf32>
    %c0_1 = arith.constant 0 : index
    %c0_2 = arith.constant 0 : index
    %6 = vector.load %arg1[%c0_1, %c0_2] : memref<12x1xi32, #tpu.memory_space<vmem>>, vector<12x1xi32>
    %7 = vector.broadcast %6 : vector<12x1xi32> to vector<12x8xi32>
    %8 = arith.cmpi eq, %7, %0 : vector<12x8xi32>
    %9 = arith.extui %8 : vector<12x8xi1> to vector<12x8xi32>
    %10 = arith.sitofp %9 : vector<12x8xi32> to vector<12x8xf32>
    %cst = arith.constant dense<0.000000e+00> : vector<8x8xf32>
    %11 = tpu.matmul %10, %5, %cst {dimension_numbers = #tpu.dot_dimension_numbers<[0], [0], [1], [1], [0, 1, 1, 1], [], []>} : vector<12x8xf32>, vector<12x8xf32>, vector<8x8xf32> -> vector<8x8xf32>
    %12 = tpu.iota {dimensions = array<i32: 0>} : vector<8x8xi32>
    %13 = tpu.iota {dimensions = array<i32: 1>} : vector<8x8xi32>
    %14 = arith.cmpi eq, %12, %13 : vector<8x8xi32>
    %cst_3 = arith.constant 1.000000e+00 : f32
    %15 = vector.broadcast %cst_3 : f32 to vector<8x8xf32>
    %16 = arith.select %14, %15, %11 : vector<8x8xi1>, vector<8x8xf32>
    %c0_4 = arith.constant 0 : index
    %c0_5 = arith.constant 0 : index
    %17 = vector.load %arg2[%c0_4, %c0_5] : memref<8x16xf32, #tpu.memory_space<vmem>>, vector<8x16xf32>
    %c0_6 = arith.constant 0 : index
    %c0_7 = arith.constant 0 : index
    %18 = vector.load %arg3[%c0_6, %c0_7] : memref<16x32xf32, #tpu.memory_space<vmem>>, vector<16x32xf32>
    %cst_8 = arith.constant dense<0.000000e+00> : vector<8x32xf32>
    %19 = tpu.matmul %17, %18, %cst_8 {dimension_numbers = #tpu.dot_dimension_numbers<[1], [0], [0], [1], [0, 0, 1, 1], [], []>} : vector<8x16xf32>, vector<16x32xf32>, vector<8x32xf32> -> vector<8x32xf32>
    %c0_9 = arith.constant 0 : index
    %c0_10 = arith.constant 0 : index
    %20 = vector.load %arg4[%c0_9, %c0_10] : memref<1x32xf32, #tpu.memory_space<vmem>>, vector<1x32xf32>
    %21 = vector.broadcast %20 : vector<1x32xf32> to vector<8x32xf32>
    %22 = arith.addf %19, %21 : vector<8x32xf32>
    %cst_11 = arith.constant 0.000000e+00 : f32
    %23 = vector.broadcast %cst_11 : f32 to vector<8x32xf32>
    %24 = arith.maximumf %22, %23 : vector<8x32xf32>
    %c0_12 = arith.constant 0 : index
    %c0_13 = arith.constant 0 : index
    %c0_14 = arith.constant 0 : index
    %25 = vector.load %arg5[%c0_12, %c0_13, %c0_14] : memref<3x32x32xf32, #tpu.memory_space<vmem>>, vector<1x32x32xf32>
    %26 = vector.shape_cast %25 : vector<1x32x32xf32> to vector<32x32xf32>
    %cst_15 = arith.constant dense<0.000000e+00> : vector<8x32xf32>
    %27 = tpu.matmul %24, %26, %cst_15 {dimension_numbers = #tpu.dot_dimension_numbers<[1], [0], [0], [1], [0, 0, 1, 1], [], []>} : vector<8x32xf32>, vector<32x32xf32>, vector<8x32xf32> -> vector<8x32xf32>
    %c0_16 = arith.constant 0 : index
    %c0_17 = arith.constant 0 : index
    %c0_18 = arith.constant 0 : index
    %28 = vector.load %arg7[%c0_16, %c0_17, %c0_18] : memref<3x1x32xf32, #tpu.memory_space<vmem>>, vector<1x1x32xf32>
    %29 = vector.shape_cast %28 : vector<1x1x32xf32> to vector<1x32xf32>
    %cst_19 = arith.constant dense<0.000000e+00> : vector<8x1xf32>
    %30 = tpu.matmul %27, %29, %cst_19 {dimension_numbers = #tpu.dot_dimension_numbers<[1], [1], [0], [0], [0, 0, 1, 0], [], []>} : vector<8x32xf32>, vector<1x32xf32>, vector<8x1xf32> -> vector<8x1xf32>
    %c0_20 = arith.constant 0 : index
    %c0_21 = arith.constant 0 : index
    %c0_22 = arith.constant 0 : index
    %31 = vector.load %arg6[%c0_20, %c0_21, %c0_22] : memref<3x1x32xf32, #tpu.memory_space<vmem>>, vector<1x1x32xf32>
    %32 = vector.shape_cast %31 : vector<1x1x32xf32> to vector<1x32xf32>
    %cst_23 = arith.constant dense<0.000000e+00> : vector<1x8xf32>
    %33 = tpu.matmul %32, %27, %cst_23 {dimension_numbers = #tpu.dot_dimension_numbers<[1], [1], [0], [0], [0, 0, 1, 0], [], []>} : vector<1x32xf32>, vector<8x32xf32>, vector<1x8xf32> -> vector<1x8xf32>
    %34 = vector.broadcast %30 : vector<8x1xf32> to vector<8x8xf32>
    %35 = vector.broadcast %33 : vector<1x8xf32> to vector<8x8xf32>
    %36 = arith.addf %34, %35 : vector<8x8xf32>
    %cst_24 = arith.constant 0.000000e+00 : f32
    %37 = vector.broadcast %cst_24 : f32 to vector<8x8xf32>
    %38 = arith.cmpf ogt, %36, %37 : vector<8x8xf32>
    %cst_25 = arith.constant 2.000000e-01 : f32
    %39 = vector.broadcast %cst_25 : f32 to vector<8x8xf32>
    %40 = arith.mulf %39, %36 : vector<8x8xf32>
    %41 = arith.select %38, %36, %40 : vector<8x8xi1>, vector<8x8xf32>
    %cst_26 = arith.constant 0.000000e+00 : f32
    %42 = vector.broadcast %cst_26 : f32 to vector<8x8xf32>
    %43 = arith.cmpf ogt, %16, %42 : vector<8x8xf32>
    %cst_27 = arith.constant -1.000000e+30 : f32
    %44 = vector.broadcast %cst_27 : f32 to vector<8x8xf32>
    %45 = arith.select %43, %41, %44 : vector<8x8xi1>, vector<8x8xf32>
    %cst_28 = arith.constant dense<0xFF800000> : vector<8xf32>
    %46 = vector.multi_reduction <maximumf>, %45, %cst_28 [1] : vector<8x8xf32> to vector<8xf32>
    %47 = vector.shape_cast %46 : vector<8xf32> to vector<8x1xf32>
    %48 = vector.broadcast %47 : vector<8x1xf32> to vector<8x8xf32>
    %49 = arith.subf %45, %48 : vector<8x8xf32>
    %50 = math.exp %49 : vector<8x8xf32>
    %51 = arith.mulf %50, %16 : vector<8x8xf32>
    %cst_29 = arith.constant dense<0.000000e+00> : vector<8xf32>
    %52 = vector.multi_reduction <add>, %51, %cst_29 [1] : vector<8x8xf32> to vector<8xf32>
    %53 = vector.shape_cast %52 : vector<8xf32> to vector<8x1xf32>
    %54 = tpu.reciprocal %53 {approx = true} : vector<8x1xf32> -> vector<8x1xf32>
    %55 = vector.broadcast %54 : vector<8x1xf32> to vector<8x8xf32>
    %56 = arith.mulf %51, %55 : vector<8x8xf32>
    %cst_30 = arith.constant dense<0.000000e+00> : vector<8x32xf32>
    %57 = tpu.matmul %56, %27, %cst_30 {dimension_numbers = #tpu.dot_dimension_numbers<[1], [0], [0], [1], [0, 0, 1, 1], [], []>} : vector<8x8xf32>, vector<8x32xf32>, vector<8x32xf32> -> vector<8x32xf32>
    %c0_31 = arith.constant 0 : index
    %c0_32 = arith.constant 0 : index
    %c0_33 = arith.constant 0 : index
    %58 = vector.load %arg8[%c0_31, %c0_32, %c0_33] : memref<3x1x32xf32, #tpu.memory_space<vmem>>, vector<1x1x32xf32>
    %59 = vector.shape_cast %58 : vector<1x1x32xf32> to vector<1x32xf32>
    %60 = vector.broadcast %59 : vector<1x32xf32> to vector<8x32xf32>
    %61 = arith.addf %57, %60 : vector<8x32xf32>
    %62 = arith.addf %24, %61 : vector<8x32xf32>
    %cst_34 = arith.constant 0.000000e+00 : f32
    %63 = vector.broadcast %cst_34 : f32 to vector<8x32xf32>
    %64 = arith.maximumf %62, %63 : vector<8x32xf32>
    %c1 = arith.constant 1 : index
    %c0_35 = arith.constant 0 : index
    %c0_36 = arith.constant 0 : index
    %65 = vector.load %arg5[%c1, %c0_35, %c0_36] : memref<3x32x32xf32, #tpu.memory_space<vmem>>, vector<1x32x32xf32>
    %66 = vector.shape_cast %65 : vector<1x32x32xf32> to vector<32x32xf32>
    %cst_37 = arith.constant dense<0.000000e+00> : vector<8x32xf32>
    %67 = tpu.matmul %64, %66, %cst_37 {dimension_numbers = #tpu.dot_dimension_numbers<[1], [0], [0], [1], [0, 0, 1, 1], [], []>} : vector<8x32xf32>, vector<32x32xf32>, vector<8x32xf32> -> vector<8x32xf32>
    %c1_38 = arith.constant 1 : index
    %c0_39 = arith.constant 0 : index
    %c0_40 = arith.constant 0 : index
    %68 = vector.load %arg7[%c1_38, %c0_39, %c0_40] : memref<3x1x32xf32, #tpu.memory_space<vmem>>, vector<1x1x32xf32>
    %69 = vector.shape_cast %68 : vector<1x1x32xf32> to vector<1x32xf32>
    %cst_41 = arith.constant dense<0.000000e+00> : vector<8x1xf32>
    %70 = tpu.matmul %67, %69, %cst_41 {dimension_numbers = #tpu.dot_dimension_numbers<[1], [1], [0], [0], [0, 0, 1, 0], [], []>} : vector<8x32xf32>, vector<1x32xf32>, vector<8x1xf32> -> vector<8x1xf32>
    %c1_42 = arith.constant 1 : index
    %c0_43 = arith.constant 0 : index
    %c0_44 = arith.constant 0 : index
    %71 = vector.load %arg6[%c1_42, %c0_43, %c0_44] : memref<3x1x32xf32, #tpu.memory_space<vmem>>, vector<1x1x32xf32>
    %72 = vector.shape_cast %71 : vector<1x1x32xf32> to vector<1x32xf32>
    %cst_45 = arith.constant dense<0.000000e+00> : vector<1x8xf32>
    %73 = tpu.matmul %72, %67, %cst_45 {dimension_numbers = #tpu.dot_dimension_numbers<[1], [1], [0], [0], [0, 0, 1, 0], [], []>} : vector<1x32xf32>, vector<8x32xf32>, vector<1x8xf32> -> vector<1x8xf32>
    %74 = vector.broadcast %70 : vector<8x1xf32> to vector<8x8xf32>
    %75 = vector.broadcast %73 : vector<1x8xf32> to vector<8x8xf32>
    %76 = arith.addf %74, %75 : vector<8x8xf32>
    %cst_46 = arith.constant 0.000000e+00 : f32
    %77 = vector.broadcast %cst_46 : f32 to vector<8x8xf32>
    %78 = arith.cmpf ogt, %76, %77 : vector<8x8xf32>
    %cst_47 = arith.constant 2.000000e-01 : f32
    %79 = vector.broadcast %cst_47 : f32 to vector<8x8xf32>
    %80 = arith.mulf %79, %76 : vector<8x8xf32>
    %81 = arith.select %78, %76, %80 : vector<8x8xi1>, vector<8x8xf32>
    %cst_48 = arith.constant 0.000000e+00 : f32
    %82 = vector.broadcast %cst_48 : f32 to vector<8x8xf32>
    %83 = arith.cmpf ogt, %16, %82 : vector<8x8xf32>
    %cst_49 = arith.constant -1.000000e+30 : f32
    %84 = vector.broadcast %cst_49 : f32 to vector<8x8xf32>
    %85 = arith.select %83, %81, %84 : vector<8x8xi1>, vector<8x8xf32>
    %cst_50 = arith.constant dense<0xFF800000> : vector<8xf32>
    %86 = vector.multi_reduction <maximumf>, %85, %cst_50 [1] : vector<8x8xf32> to vector<8xf32>
    %87 = vector.shape_cast %86 : vector<8xf32> to vector<8x1xf32>
    %88 = vector.broadcast %87 : vector<8x1xf32> to vector<8x8xf32>
    %89 = arith.subf %85, %88 : vector<8x8xf32>
    %90 = math.exp %89 : vector<8x8xf32>
    %91 = arith.mulf %90, %16 : vector<8x8xf32>
    %cst_51 = arith.constant dense<0.000000e+00> : vector<8xf32>
    %92 = vector.multi_reduction <add>, %91, %cst_51 [1] : vector<8x8xf32> to vector<8xf32>
    %93 = vector.shape_cast %92 : vector<8xf32> to vector<8x1xf32>
    %94 = tpu.reciprocal %93 {approx = true} : vector<8x1xf32> -> vector<8x1xf32>
    %95 = vector.broadcast %94 : vector<8x1xf32> to vector<8x8xf32>
    %96 = arith.mulf %91, %95 : vector<8x8xf32>
    %cst_52 = arith.constant dense<0.000000e+00> : vector<8x32xf32>
    %97 = tpu.matmul %96, %67, %cst_52 {dimension_numbers = #tpu.dot_dimension_numbers<[1], [0], [0], [1], [0, 0, 1, 1], [], []>} : vector<8x8xf32>, vector<8x32xf32>, vector<8x32xf32> -> vector<8x32xf32>
    %c1_53 = arith.constant 1 : index
    %c0_54 = arith.constant 0 : index
    %c0_55 = arith.constant 0 : index
    %98 = vector.load %arg8[%c1_53, %c0_54, %c0_55] : memref<3x1x32xf32, #tpu.memory_space<vmem>>, vector<1x1x32xf32>
    %99 = vector.shape_cast %98 : vector<1x1x32xf32> to vector<1x32xf32>
    %100 = vector.broadcast %99 : vector<1x32xf32> to vector<8x32xf32>
    %101 = arith.addf %97, %100 : vector<8x32xf32>
    %102 = arith.addf %64, %101 : vector<8x32xf32>
    %cst_56 = arith.constant 0.000000e+00 : f32
    %103 = vector.broadcast %cst_56 : f32 to vector<8x32xf32>
    %104 = arith.maximumf %102, %103 : vector<8x32xf32>
    %c2 = arith.constant 2 : index
    %c0_57 = arith.constant 0 : index
    %c0_58 = arith.constant 0 : index
    %105 = vector.load %arg5[%c2, %c0_57, %c0_58] : memref<3x32x32xf32, #tpu.memory_space<vmem>>, vector<1x32x32xf32>
    %106 = vector.shape_cast %105 : vector<1x32x32xf32> to vector<32x32xf32>
    %cst_59 = arith.constant dense<0.000000e+00> : vector<8x32xf32>
    %107 = tpu.matmul %104, %106, %cst_59 {dimension_numbers = #tpu.dot_dimension_numbers<[1], [0], [0], [1], [0, 0, 1, 1], [], []>} : vector<8x32xf32>, vector<32x32xf32>, vector<8x32xf32> -> vector<8x32xf32>
    %c2_60 = arith.constant 2 : index
    %c0_61 = arith.constant 0 : index
    %c0_62 = arith.constant 0 : index
    %108 = vector.load %arg7[%c2_60, %c0_61, %c0_62] : memref<3x1x32xf32, #tpu.memory_space<vmem>>, vector<1x1x32xf32>
    %109 = vector.shape_cast %108 : vector<1x1x32xf32> to vector<1x32xf32>
    %cst_63 = arith.constant dense<0.000000e+00> : vector<8x1xf32>
    %110 = tpu.matmul %107, %109, %cst_63 {dimension_numbers = #tpu.dot_dimension_numbers<[1], [1], [0], [0], [0, 0, 1, 0], [], []>} : vector<8x32xf32>, vector<1x32xf32>, vector<8x1xf32> -> vector<8x1xf32>
    %c2_64 = arith.constant 2 : index
    %c0_65 = arith.constant 0 : index
    %c0_66 = arith.constant 0 : index
    %111 = vector.load %arg6[%c2_64, %c0_65, %c0_66] : memref<3x1x32xf32, #tpu.memory_space<vmem>>, vector<1x1x32xf32>
    %112 = vector.shape_cast %111 : vector<1x1x32xf32> to vector<1x32xf32>
    %cst_67 = arith.constant dense<0.000000e+00> : vector<1x8xf32>
    %113 = tpu.matmul %112, %107, %cst_67 {dimension_numbers = #tpu.dot_dimension_numbers<[1], [1], [0], [0], [0, 0, 1, 0], [], []>} : vector<1x32xf32>, vector<8x32xf32>, vector<1x8xf32> -> vector<1x8xf32>
    %114 = vector.broadcast %110 : vector<8x1xf32> to vector<8x8xf32>
    %115 = vector.broadcast %113 : vector<1x8xf32> to vector<8x8xf32>
    %116 = arith.addf %114, %115 : vector<8x8xf32>
    %cst_68 = arith.constant 0.000000e+00 : f32
    %117 = vector.broadcast %cst_68 : f32 to vector<8x8xf32>
    %118 = arith.cmpf ogt, %116, %117 : vector<8x8xf32>
    %cst_69 = arith.constant 2.000000e-01 : f32
    %119 = vector.broadcast %cst_69 : f32 to vector<8x8xf32>
    %120 = arith.mulf %119, %116 : vector<8x8xf32>
    %121 = arith.select %118, %116, %120 : vector<8x8xi1>, vector<8x8xf32>
    %cst_70 = arith.constant 0.000000e+00 : f32
    %122 = vector.broadcast %cst_70 : f32 to vector<8x8xf32>
    %123 = arith.cmpf ogt, %16, %122 : vector<8x8xf32>
    %cst_71 = arith.constant -1.000000e+30 : f32
    %124 = vector.broadcast %cst_71 : f32 to vector<8x8xf32>
    %125 = arith.select %123, %121, %124 : vector<8x8xi1>, vector<8x8xf32>
    %cst_72 = arith.constant dense<0xFF800000> : vector<8xf32>
    %126 = vector.multi_reduction <maximumf>, %125, %cst_72 [1] : vector<8x8xf32> to vector<8xf32>
    %127 = vector.shape_cast %126 : vector<8xf32> to vector<8x1xf32>
    %128 = vector.broadcast %127 : vector<8x1xf32> to vector<8x8xf32>
    %129 = arith.subf %125, %128 : vector<8x8xf32>
    %130 = math.exp %129 : vector<8x8xf32>
    %131 = arith.mulf %130, %16 : vector<8x8xf32>
    %cst_73 = arith.constant dense<0.000000e+00> : vector<8xf32>
    %132 = vector.multi_reduction <add>, %131, %cst_73 [1] : vector<8x8xf32> to vector<8xf32>
    %133 = vector.shape_cast %132 : vector<8xf32> to vector<8x1xf32>
    %134 = tpu.reciprocal %133 {approx = true} : vector<8x1xf32> -> vector<8x1xf32>
    %135 = vector.broadcast %134 : vector<8x1xf32> to vector<8x8xf32>
    %136 = arith.mulf %131, %135 : vector<8x8xf32>
    %cst_74 = arith.constant dense<0.000000e+00> : vector<8x32xf32>
    %137 = tpu.matmul %136, %107, %cst_74 {dimension_numbers = #tpu.dot_dimension_numbers<[1], [0], [0], [1], [0, 0, 1, 1], [], []>} : vector<8x8xf32>, vector<8x32xf32>, vector<8x32xf32> -> vector<8x32xf32>
    %c2_75 = arith.constant 2 : index
    %c0_76 = arith.constant 0 : index
    %c0_77 = arith.constant 0 : index
    %138 = vector.load %arg8[%c2_75, %c0_76, %c0_77] : memref<3x1x32xf32, #tpu.memory_space<vmem>>, vector<1x1x32xf32>
    %139 = vector.shape_cast %138 : vector<1x1x32xf32> to vector<1x32xf32>
    %140 = vector.broadcast %139 : vector<1x32xf32> to vector<8x32xf32>
    %141 = arith.addf %137, %140 : vector<8x32xf32>
    %142 = arith.addf %104, %141 : vector<8x32xf32>
    %cst_78 = arith.constant 0.000000e+00 : f32
    %143 = vector.broadcast %cst_78 : f32 to vector<8x32xf32>
    %144 = arith.maximumf %142, %143 : vector<8x32xf32>
    %c0_79 = arith.constant 0 : index
    %c0_80 = arith.constant 0 : index
    %145 = vector.load %arg9[%c0_79, %c0_80] : memref<32x32xf32, #tpu.memory_space<vmem>>, vector<32x32xf32>
    %cst_81 = arith.constant dense<0.000000e+00> : vector<8x32xf32>
    %146 = tpu.matmul %144, %145, %cst_81 {dimension_numbers = #tpu.dot_dimension_numbers<[1], [0], [0], [1], [0, 0, 1, 1], [], []>} : vector<8x32xf32>, vector<32x32xf32>, vector<8x32xf32> -> vector<8x32xf32>
    %c0_82 = arith.constant 0 : index
    %c0_83 = arith.constant 0 : index
    %147 = vector.load %arg10[%c0_82, %c0_83] : memref<1x32xf32, #tpu.memory_space<vmem>>, vector<1x32xf32>
    %148 = vector.broadcast %147 : vector<1x32xf32> to vector<8x32xf32>
    %149 = arith.addf %146, %148 : vector<8x32xf32>
    %cst_84 = arith.constant 0.000000e+00 : f32
    %150 = vector.broadcast %cst_84 : f32 to vector<8x32xf32>
    %151 = arith.maximumf %149, %150 : vector<8x32xf32>
    %c0_85 = arith.constant 0 : index
    %c0_86 = arith.constant 0 : index
    %152 = vector.load %arg11[%c0_85, %c0_86] : memref<32x128xf32, #tpu.memory_space<vmem>>, vector<32x128xf32>
    %cst_87 = arith.constant dense<0.000000e+00> : vector<8x128xf32>
    %153 = tpu.matmul %151, %152, %cst_87 {dimension_numbers = #tpu.dot_dimension_numbers<[1], [0], [0], [1], [0, 0, 1, 1], [], []>} : vector<8x32xf32>, vector<32x128xf32>, vector<8x128xf32> -> vector<8x128xf32>
    %c0_88 = arith.constant 0 : index
    %c0_89 = arith.constant 0 : index
    %154 = vector.load %arg12[%c0_88, %c0_89] : memref<1x128xf32, #tpu.memory_space<vmem>>, vector<1x128xf32>
    %155 = vector.broadcast %154 : vector<1x128xf32> to vector<8x128xf32>
    %156 = arith.addf %153, %155 : vector<8x128xf32>
    %c0_90 = arith.constant 0 : index
    %c0_91 = arith.constant 0 : index
    %157 = vector.load %arg18[%c0_90, %c0_91] : memref<8x128xf32, #tpu.memory_space<vmem>>, vector<8x128xf32>
    tpu.vector_store %arg18[%c0_90, %c0_91], %156 {strides = array<i32>} : memref<8x128xf32, #tpu.memory_space<vmem>>, vector<8x128xf32>,
    %cst_92 = arith.constant dense<0.000000e+00> : vector<32xf32>
    %158 = vector.multi_reduction <add>, %144, %cst_92 [0] : vector<8x32xf32> to vector<32xf32>
    %159 = vector.shape_cast %158 : vector<32xf32> to vector<1x32xf32>
    %cst_93 = arith.constant 8.000000e+00 : f32
    %160 = vector.broadcast %cst_93 : f32 to vector<1x32xf32>
    %161 = arith.divf %159, %160 : vector<1x32xf32>
    %cst_94 = arith.constant 0.000000e+00 : f32
    %162 = vector.broadcast %cst_94 : f32 to vector<1x96xf32>
    %163 = tpu.concatenate %161, %162 in 1 : vector<1x32xf32>, vector<1x96xf32> -> vector<1x128xf32>
    %c0_95 = arith.constant 0 : index
    %c0_96 = arith.constant 0 : index
    %164 = vector.load %arg20[%c0_95, %c0_96] : memref<1x128xf32, #tpu.memory_space<vmem>>, vector<1x128xf32>
    tpu.vector_store %arg20[%c0_95, %c0_96], %163 {strides = array<i32>} : memref<1x128xf32, #tpu.memory_space<vmem>>, vector<1x128xf32>,
    %c0_97 = arith.constant 0 : index
    %c0_98 = arith.constant 0 : index
    %165 = vector.load %arg13[%c0_97, %c0_98] : memref<32x32xf32, #tpu.memory_space<vmem>>, vector<32x32xf32>
    %cst_99 = arith.constant dense<0.000000e+00> : vector<8x32xf32>
    %166 = tpu.matmul %144, %165, %cst_99 {dimension_numbers = #tpu.dot_dimension_numbers<[1], [0], [0], [1], [0, 0, 1, 1], [], []>} : vector<8x32xf32>, vector<32x32xf32>, vector<8x32xf32> -> vector<8x32xf32>
    %c0_100 = arith.constant 0 : index
    %c0_101 = arith.constant 0 : index
    %167 = vector.load %arg14[%c0_100, %c0_101] : memref<32x32xf32, #tpu.memory_space<vmem>>, vector<32x32xf32>
    %cst_102 = arith.constant dense<0.000000e+00> : vector<8x32xf32>
    %168 = tpu.matmul %144, %167, %cst_102 {dimension_numbers = #tpu.dot_dimension_numbers<[1], [0], [0], [1], [0, 0, 1, 1], [], []>} : vector<8x32xf32>, vector<32x32xf32>, vector<8x32xf32> -> vector<8x32xf32>
    %cst_103 = arith.constant dense<0.000000e+00> : vector<12x32xf32>
    %169 = tpu.matmul %5, %166, %cst_103 {dimension_numbers = #tpu.dot_dimension_numbers<[1], [0], [0], [1], [0, 0, 1, 1], [], []>} : vector<12x8xf32>, vector<8x32xf32>, vector<12x32xf32> -> vector<12x32xf32>
    %cst_104 = arith.constant dense<0.000000e+00> : vector<12x32xf32>
    %170 = tpu.matmul %10, %168, %cst_104 {dimension_numbers = #tpu.dot_dimension_numbers<[1], [0], [0], [1], [0, 0, 1, 1], [], []>} : vector<12x8xf32>, vector<8x32xf32>, vector<12x32xf32> -> vector<12x32xf32>
    %171 = arith.addf %169, %170 : vector<12x32xf32>
    %c0_105 = arith.constant 0 : index
    %c0_106 = arith.constant 0 : index
    %172 = vector.load %arg15[%c0_105, %c0_106] : memref<1x32xf32, #tpu.memory_space<vmem>>, vector<1x32xf32>
    %173 = vector.broadcast %172 : vector<1x32xf32> to vector<12x32xf32>
    %174 = arith.addf %171, %173 : vector<12x32xf32>
    %cst_107 = arith.constant 0.000000e+00 : f32
    %175 = vector.broadcast %cst_107 : f32 to vector<12x32xf32>
    %176 = arith.maximumf %174, %175 : vector<12x32xf32>
    %c0_108 = arith.constant 0 : index
    %c0_109 = arith.constant 0 : index
    %177 = vector.load %arg16[%c0_108, %c0_109] : memref<32x128xf32, #tpu.memory_space<vmem>>, vector<32x128xf32>
    %cst_110 = arith.constant dense<0.000000e+00> : vector<12x128xf32>
    %178 = tpu.matmul %176, %177, %cst_110 {dimension_numbers = #tpu.dot_dimension_numbers<[1], [0], [0], [1], [0, 0, 1, 1], [], []>} : vector<12x32xf32>, vector<32x128xf32>, vector<12x128xf32> -> vector<12x128xf32>
    %c0_111 = arith.constant 0 : index
    %c0_112 = arith.constant 0 : index
    %179 = vector.load %arg17[%c0_111, %c0_112] : memref<1x128xf32, #tpu.memory_space<vmem>>, vector<1x128xf32>
    %180 = vector.broadcast %179 : vector<1x128xf32> to vector<12x128xf32>
    %181 = arith.addf %178, %180 : vector<12x128xf32>
    %c0_113 = arith.constant 0 : index
    %c0_114 = arith.constant 0 : index
    %182 = vector.load %arg19[%c0_113, %c0_114] : memref<12x128xf32, #tpu.memory_space<vmem>>, vector<12x128xf32>
    tpu.vector_store %arg19[%c0_113, %c0_114], %181 {strides = array<i32>} : memref<12x128xf32, #tpu.memory_space<vmem>>, vector<12x128xf32>,
    return
  }
}

</mosaic_0001>

<llo_original>
// kernel: process_mapping_gnn_forward.1
$region0: #{process_mapping_gnn_forward.1}
  #allocation0 [shape = 'u32[]', space=smem, size = 0x4, offset = 0x4, fixed_abs, tag = 'smem constant byte address 0x4 - core index']
  #allocation1 [shape = 'u32[72,128]{1,0:T(1,128)}', space=vmem, size = 0x9000, scoped, tag = 'internal scratch']
  %s0 = inlined_call_operand.vmem [shape: s32[12,1], index: 0, kind: input, shape index: {}]
  %s1 = inlined_call_operand.vmem [shape: s32[12,1], index: 1, kind: input, shape index: {}]
  %s2 = inlined_call_operand.vmem [shape: f32[8,16], index: 2, kind: input, shape index: {}]
  %s3 = inlined_call_operand.hbm [shape: f32[16,32], index: 3, kind: input, shape index: {}]
  %s4 = inlined_call_operand.hbm [shape: f32[1,32], index: 4, kind: input, shape index: {}]
  %s5 = inlined_call_operand.hbm [shape: f32[3,32,32], index: 5, kind: input, shape index: {}]
  %s6 = inlined_call_operand.vmem [shape: f32[3,1,32], index: 6, kind: input, shape index: {}]
  %s7 = inlined_call_operand.hbm [shape: f32[3,1,32], index: 7, kind: input, shape index: {}]
  %s8 = inlined_call_operand.vmem [shape: f32[3,1,32], index: 8, kind: input, shape index: {}]
  %s9 = inlined_call_operand.vmem [shape: f32[32,32], index: 9, kind: input, shape index: {}]
  %s10 = inlined_call_operand.vmem [shape: f32[1,32], index: 10, kind: input, shape index: {}]
  %s11 = inlined_call_operand.hbm [shape: f32[32,128], index: 11, kind: input, shape index: {}]
  %s12 = inlined_call_operand.vmem [shape: f32[1,128], index: 12, kind: input, shape index: {}]
  %s13 = inlined_call_operand.hbm [shape: f32[32,32], index: 13, kind: input, shape index: {}]
  %s14 = inlined_call_operand.hbm [shape: f32[32,32], index: 14, kind: input, shape index: {}]
  %s15 = inlined_call_operand.hbm [shape: f32[1,32], index: 15, kind: input, shape index: {}]
  %s16 = inlined_call_operand.hbm [shape: f32[32,128], index: 16, kind: input, shape index: {}]
  %s17 = inlined_call_operand.hbm [shape: f32[1,128], index: 17, kind: input, shape index: {}]
  %s18 = inlined_call_operand.hbm [shape: f32[8,128], index: 18, kind: output, shape index: {0}]
  %s19 = inlined_call_operand.vmem [shape: f32[12,128], index: 19, kind: output, shape index: {1}]
  %s20 = inlined_call_operand.hbm [shape: f32[1,128], index: 20, kind: output, shape index: {2}]
  %21 = xla_tuple %s18, %s19, %s20
  %s22 = sld [smem:[#allocation0]]
  $region138: #{process_mapping_gnn_forward.1} parent=0
    _
  %s24 = ssub.s32 1, %s22
  %s25 = scalar_select 0, %s24, %s22
  $region1: #{process_mapping_gnn_forward.1} parent=0
    #allocation2 [shape = 'u8[8192]{0}', space=vmem, size = 0x2000, scoped, tag = 'input window, operand 3, single buffered']
    #allocation3 [shape = 's32[1]{0}', space=sflag, size = 0x4, scoped, tag = 'scoped memory for process_mapping_gnn_forward.1']
    #allocation4 [shape = 's32[1]{0}', space=sflag, size = 0x4, scoped, tag = 'scoped memory for process_mapping_gnn_forward.1']
    #allocation5 [shape = 'u8[512]{0}', space=vmem, size = 0x400, scoped, tag = 'input window, operand 4, single buffered']
    #allocation6 [shape = 's32[1]{0}', space=sflag, size = 0x4, scoped, tag = 'scoped memory for process_mapping_gnn_forward.1']
    #allocation7 [shape = 'u8[49152]{0}', space=vmem, size = 0xc000, scoped, tag = 'input window, operand 5, single buffered']
    #allocation8 [shape = 'u8[1536]{0}', space=vmem, size = 0x800, scoped, tag = 'input window, operand 7, single buffered']
    #allocation9 [shape = 's32[1]{0}', space=sflag, size = 0x4, scoped, tag = 'scoped memory for process_mapping_gnn_forward.1']
    #allocation10 [shape = 'u8[16384]{0}', space=vmem, size = 0x4000, scoped, tag = 'input window, operand 11, single buffered']
    #allocation11 [shape = 'u8[16384]{0}', space=vmem, size = 0x4000, scoped, tag = 'input window, operand 13, single buffered']
    #allocation12 [shape = 's32[1]{0}', space=sflag, size = 0x4, scoped, tag = 'scoped memory for process_mapping_gnn_forward.1']
    #allocation13 [shape = 'u8[16384]{0}', space=vmem, size = 0x4000, scoped, tag = 'input window, operand 14, single buffered']
    #allocation14 [shape = 'u8[512]{0}', space=vmem, size = 0x400, scoped, tag = 'input window, operand 15, single buffered']
    #allocation15 [shape = 's32[1]{0}', space=sflag, size = 0x4, scoped, tag = 'scoped memory for process_mapping_gnn_forward.1']
    #allocation16 [shape = 'u8[16384]{0}', space=vmem, size = 0x4000, scoped, tag = 'input window, operand 16, single buffered']
    #allocation17 [shape = 'u8[512]{0}', space=vmem, size = 0x400, scoped, tag = 'input window, operand 17, single buffered']
    #allocation18 [shape = 's32[1]{0}', space=sflag, size = 0x4, scoped, tag = 'scoped memory for process_mapping_gnn_forward.1']
    #allocation19 [shape = 'u8[4096]{0}', space=vmem, size = 0x1000, scoped, tag = 'output window, operand 0, single buffered']
    #allocation20 [shape = 'u8[512]{0}', space=vmem, size = 0x400, scoped, tag = 'output window, operand 2, single buffered']
    #allocation21 [shape = 's32[1]{0}', space=sflag, size = 0x4, scoped, tag = 'scoped memory for process_mapping_gnn_forward.1']
    %26 = vsyncpa [#allocation3], 0
    %27 = vsyncpa [#allocation6], 0
    %28 = vsyncpa [#allocation9], 0
    %29 = vsyncpa [#allocation12], 0
    %30 = vsyncpa [#allocation15], 0
    %31 = vsyncpa [#allocation18], 0
    %32 = vsyncpa [#allocation4], 0
    %33 = vsyncpa [#allocation21], 0
    // Predicated region
    $region2: #{process_mapping_gnn_forward.1} parent=1 // pred_check
      _
    $region3: #{process_mapping_gnn_forward.1} parent=1 // pred_check_branch
      %35 = sbr.rel (0) target = $region5
    $region4: #{process_mapping_gnn_forward.1} parent=1 // pred_region
      _
    $region5: #{process_mapping_gnn_forward.1} parent=1 // pred_fallthru
      _
    // Predicated region
    $region6: #{process_mapping_gnn_forward.1} parent=1 // pred_check
      _
    $region7: #{process_mapping_gnn_forward.1} parent=1 // pred_check_branch
      %37 = sbr.rel (0) target = $region9
    $region8: #{process_mapping_gnn_forward.1} parent=1 // pred_region
      _
    $region9: #{process_mapping_gnn_forward.1} parent=1 // pred_fallthru
      _
    // Predicated region
    $region10: #{process_mapping_gnn_forward.1} parent=1 // pred_check
      _
    $region11: #{process_mapping_gnn_forward.1} parent=1 // pred_check_branch
      %39 = sbr.rel (0) target = $region13
    $region12: #{process_mapping_gnn_forward.1} parent=1 // pred_region
      _
    $region13: #{process_mapping_gnn_forward.1} parent=1 // pred_fallthru
      _
    // Predicated region
    $region14: #{process_mapping_gnn_forward.1} parent=1 // pred_check
      _
    $region15: #{process_mapping_gnn_forward.1} parent=1 // pred_check_branch
      %41 = sbr.rel (0) target = $region17
    $region16: #{process_mapping_gnn_forward.1} parent=1 // pred_region
      %43 = vsyncadd [#allocation3], 0
      %s44 = sshll.u32 %s3, 4
      %s45 = int_to_ptr.hbm [resolvable:$true] %s44
      %s46 = sshll.u32 [#allocation2], 4
      %s47 = int_to_ptr.vmem [resolvable:$true] %s46
      %52 = dma.hbm_to_vmem [thread:$0]  %s45, 256, %s47, [#allocation3], 128, 128, 8
    $region17: #{process_mapping_gnn_forward.1} parent=1 // pred_fallthru
      _
    // Predicated region
    $region18: #{process_mapping_gnn_forward.1} parent=1 // pred_check
      _
    $region19: #{process_mapping_gnn_forward.1} parent=1 // pred_check_branch
      %54 = sbr.rel (0) target = $region21
    $region20: #{process_mapping_gnn_forward.1} parent=1 // pred_region
      %56 = vsyncadd [#allocation6], 0
      %s58 = sshll.u32 %s4, 4
      %s59 = int_to_ptr.hbm [resolvable:$true] %s58
      %s60 = sshll.u32 [#allocation5], 4
      %s61 = int_to_ptr.vmem [resolvable:$true] %s60
      %63 = dma.hbm_to_vmem [thread:$0]  %s59, 16, %s61, [#allocation6]
    $region21: #{process_mapping_gnn_forward.1} parent=1 // pred_fallthru
      _
    // Predicated region
    $region22: #{process_mapping_gnn_forward.1} parent=1 // pred_check
      _
    $region23: #{process_mapping_gnn_forward.1} parent=1 // pred_check_branch
      %65 = sbr.rel (0) target = $region25
    $region24: #{process_mapping_gnn_forward.1} parent=1 // pred_region
      %67 = vsyncadd [#allocation6], 0
      %s68 = sshll.u32 %s5, 4
      %s69 = int_to_ptr.hbm [resolvable:$true] %s68
      %s70 = sshll.u32 [#allocation7], 4
      %s71 = int_to_ptr.vmem [resolvable:$true] %s70
      %76 = dma.hbm_to_vmem [thread:$0]  %s69, 1536, %s71, [#allocation6], 128, 128, 8
    $region25: #{process_mapping_gnn_forward.1} parent=1 // pred_fallthru
      _
    // Predicated region
    $region26: #{process_mapping_gnn_forward.1} parent=1 // pred_check
      _
    $region27: #{process_mapping_gnn_forward.1} parent=1 // pred_check_branch
      %78 = sbr.rel (0) target = $region29
    $region28: #{process_mapping_gnn_forward.1} parent=1 // pred_region
      _
    $region29: #{process_mapping_gnn_forward.1} parent=1 // pred_fallthru
      _
    // Predicated region
    $region30: #{process_mapping_gnn_forward.1} parent=1 // pred_check
      _
    $region31: #{process_mapping_gnn_forward.1} parent=1 // pred_check_branch
      %80 = sbr.rel (0) target = $region33
    $region32: #{process_mapping_gnn_forward.1} parent=1 // pred_region
      %82 = vsyncadd [#allocation9], 0
      %s83 = sshll.u32 %s7, 4
      %s84 = int_to_ptr.hbm [resolvable:$true] %s83
      %s85 = sshll.u32 [#allocation8], 4
      %s86 = int_to_ptr.vmem [resolvable:$true] %s85
      %91 = dma.hbm_to_vmem [thread:$0]  %s84, 48, %s86, [#allocation9], 16, 16, 1
    $region33: #{process_mapping_gnn_forward.1} parent=1 // pred_fallthru
      _
    // Predicated region
    $region34: #{process_mapping_gnn_forward.1} parent=1 // pred_check
      _
    $region35: #{process_mapping_gnn_forward.1} parent=1 // pred_check_branch
      %93 = sbr.rel (0) target = $region37
    $region36: #{process_mapping_gnn_forward.1} parent=1 // pred_region
      _
    $region37: #{process_mapping_gnn_forward.1} parent=1 // pred_fallthru
      _
    // Predicated region
    $region38: #{process_mapping_gnn_forward.1} parent=1 // pred_check
      _
    $region39: #{process_mapping_gnn_forward.1} parent=1 // pred_check_branch
      %95 = sbr.rel (0) target = $region41
    $region40: #{process_mapping_gnn_forward.1} parent=1 // pred_region
      _
    $region41: #{process_mapping_gnn_forward.1} parent=1 // pred_fallthru
      _
    // Predicated region
    $region42: #{process_mapping_gnn_forward.1} parent=1 // pred_check
      _
    $region43: #{process_mapping_gnn_forward.1} parent=1 // pred_check_branch
      %97 = sbr.rel (0) target = $region45
    $region44: #{process_mapping_gnn_forward.1} parent=1 // pred_region
      _
    $region45: #{process_mapping_gnn_forward.1} parent=1 // pred_fallthru
      _
    // Predicated region
    $region46: #{process_mapping_gnn_forward.1} parent=1 // pred_check
      _
    $region47: #{process_mapping_gnn_forward.1} parent=1 // pred_check_branch
      %99 = sbr.rel (0) target = $region49
    $region48: #{process_mapping_gnn_forward.1} parent=1 // pred_region
      %101 = vsyncadd [#allocation9], 0
      %s102 = sshll.u32 %s11, 4
      %s103 = int_to_ptr.hbm [resolvable:$true] %s102
      %s104 = sshll.u32 [#allocation10], 4
      %s105 = int_to_ptr.vmem [resolvable:$true] %s104
      %110 = dma.hbm_to_vmem [thread:$0]  %s103, 512, %s105, [#allocation9], 128, 128, 8
    $region49: #{process_mapping_gnn_forward.1} parent=1 // pred_fallthru
      _
    // Predicated region
    $region50: #{process_mapping_gnn_forward.1} parent=1 // pred_check
      _
    $region51: #{process_mapping_gnn_forward.1} parent=1 // pred_check_branch
      %112 = sbr.rel (0) target = $region53
    $region52: #{process_mapping_gnn_forward.1} parent=1 // pred_region
      _
    $region53: #{process_mapping_gnn_forward.1} parent=1 // pred_fallthru
      _
    // Predicated region
    $region54: #{process_mapping_gnn_forward.1} parent=1 // pred_check
      _
    $region55: #{process_mapping_gnn_forward.1} parent=1 // pred_check_branch
      %114 = sbr.rel (0) target = $region57
    $region56: #{process_mapping_gnn_forward.1} parent=1 // pred_region
      %116 = vsyncadd [#allocation12], 0
      %s117 = sshll.u32 %s13, 4
      %s118 = int_to_ptr.hbm [resolvable:$true] %s117
      %s119 = sshll.u32 [#allocation11], 4
      %s120 = int_to_ptr.vmem [resolvable:$true] %s119
      %125 = dma.hbm_to_vmem [thread:$0]  %s118, 512, %s120, [#allocation12], 128, 128, 8
    $region57: #{process_mapping_gnn_forward.1} parent=1 // pred_fallthru
      _
    // Predicated region
    $region58: #{process_mapping_gnn_forward.1} parent=1 // pred_check
      _
    $region59: #{process_mapping_gnn_forward.1} parent=1 // pred_check_branch
      %127 = sbr.rel (0) target = $region61
    $region60: #{process_mapping_gnn_forward.1} parent=1 // pred_region
      %129 = vsyncadd [#allocation12], 0
      %s130 = sshll.u32 %s14, 4
      %s131 = int_to_ptr.hbm [resolvable:$true] %s130
      %s132 = sshll.u32 [#allocation13], 4
      %s133 = int_to_ptr.vmem [resolvable:$true] %s132
      %138 = dma.hbm_to_vmem [thread:$0]  %s131, 512, %s133, [#allocation12], 128, 128, 8
    $region61: #{process_mapping_gnn_forward.1} parent=1 // pred_fallthru
      _
    // Predicated region
    $region62: #{process_mapping_gnn_forward.1} parent=1 // pred_check
      _
    $region63: #{process_mapping_gnn_forward.1} parent=1 // pred_check_branch
      %140 = sbr.rel (0) target = $region65
    $region64: #{process_mapping_gnn_forward.1} parent=1 // pred_region
      %142 = vsyncadd [#allocation15], 0
      %s144 = sshll.u32 %s15, 4
      %s145 = int_to_ptr.hbm [resolvable:$true] %s144
      %s146 = sshll.u32 [#allocation14], 4
      %s147 = int_to_ptr.vmem [resolvable:$true] %s146
      %149 = dma.hbm_to_vmem [thread:$0]  %s145, 16, %s147, [#allocation15]
    $region65: #{process_mapping_gnn_forward.1} parent=1 // pred_fallthru
      _
    // Predicated region
    $region66: #{process_mapping_gnn_forward.1} parent=1 // pred_check
      _
    $region67: #{process_mapping_gnn_forward.1} parent=1 // pred_check_branch
      %151 = sbr.rel (0) target = $region69
    $region68: #{process_mapping_gnn_forward.1} parent=1 // pred_region
      %153 = vsyncadd [#allocation15], 0
      %s154 = sshll.u32 %s16, 4
      %s155 = int_to_ptr.hbm [resolvable:$true] %s154
      %s156 = sshll.u32 [#allocation16], 4
      %s157 = int_to_ptr.vmem [resolvable:$true] %s156
      %162 = dma.hbm_to_vmem [thread:$0]  %s155, 512, %s157, [#allocation15], 128, 128, 8
    $region69: #{process_mapping_gnn_forward.1} parent=1 // pred_fallthru
      _
    // Predicated region
    $region70: #{process_mapping_gnn_forward.1} parent=1 // pred_check
      _
    $region71: #{process_mapping_gnn_forward.1} parent=1 // pred_check_branch
      %164 = sbr.rel (0) target = $region73
    $region72: #{process_mapping_gnn_forward.1} parent=1 // pred_region
      %166 = vsyncadd [#allocation18], 0
      %s168 = sshll.u32 %s17, 4
      %s169 = int_to_ptr.hbm [resolvable:$true] %s168
      %s170 = sshll.u32 [#allocation17], 4
      %s171 = int_to_ptr.vmem [resolvable:$true] %s170
      %173 = dma.hbm_to_vmem [thread:$0]  %s169, 16, %s171, [#allocation18]
    $region73: #{process_mapping_gnn_forward.1} parent=1 // pred_fallthru
      _
    // Predicated region
    $region74: #{process_mapping_gnn_forward.1} parent=1 // pred_check
      _
    $region75: #{process_mapping_gnn_forward.1} parent=1 // pred_check_branch
      %175 = sbr.rel (0) target = $region77
    $region76: #{process_mapping_gnn_forward.1} parent=1 // pred_region
      %177 = dma.done [#allocation3], 256
    $region77: #{process_mapping_gnn_forward.1} parent=1 // pred_fallthru
      _
    // Predicated region
    $region78: #{process_mapping_gnn_forward.1} parent=1 // pred_check
      _
    $region79: #{process_mapping_gnn_forward.1} parent=1 // pred_check_branch
      %179 = sbr.rel (0) target = $region81
    $region80: #{process_mapping_gnn_forward.1} parent=1 // pred_region
      %181 = dma.done [#allocation6], 16
    $region81: #{process_mapping_gnn_forward.1} parent=1 // pred_fallthru
      _
    // Predicated region
    $region82: #{process_mapping_gnn_forward.1} parent=1 // pred_check
      _
    $region83: #{process_mapping_gnn_forward.1} parent=1 // pred_check_branch
      %183 = sbr.rel (0) target = $region85
    $region84: #{process_mapping_gnn_forward.1} parent=1 // pred_region
      %185 = dma.done [#allocation6], 1536
    $region85: #{process_mapping_gnn_forward.1} parent=1 // pred_fallthru
      _
    // Predicated region
    $region86: #{process_mapping_gnn_forward.1} parent=1 // pred_check
      _
    $region87: #{process_mapping_gnn_forward.1} parent=1 // pred_check_branch
      %187 = sbr.rel (0) target = $region89
    $region88: #{process_mapping_gnn_forward.1} parent=1 // pred_region
      %189 = dma.done [#allocation9], 48
    $region89: #{process_mapping_gnn_forward.1} parent=1 // pred_fallthru
      _
    // Predicated region
    $region90: #{process_mapping_gnn_forward.1} parent=1 // pred_check
      _
    $region91: #{process_mapping_gnn_forward.1} parent=1 // pred_check_branch
      %191 = sbr.rel (0) target = $region93
    $region92: #{process_mapping_gnn_forward.1} parent=1 // pred_region
      %193 = dma.done [#allocation9], 512
    $region93: #{process_mapping_gnn_forward.1} parent=1 // pred_fallthru
      _
    // Predicated region
    $region94: #{process_mapping_gnn_forward.1} parent=1 // pred_check
      _
    $region95: #{process_mapping_gnn_forward.1} parent=1 // pred_check_branch
      %195 = sbr.rel (0) target = $region97
    $region96: #{process_mapping_gnn_forward.1} parent=1 // pred_region
      %197 = dma.done [#allocation12], 512
    $region97: #{process_mapping_gnn_forward.1} parent=1 // pred_fallthru
      _
    // Predicated region
    $region98: #{process_mapping_gnn_forward.1} parent=1 // pred_check
      _
    $region99: #{process_mapping_gnn_forward.1} parent=1 // pred_check_branch
      %199 = sbr.rel (0) target = $region101
    $region100: #{process_mapping_gnn_forward.1} parent=1 // pred_region
      %201 = dma.done [#allocation12], 512
    $region101: #{process_mapping_gnn_forward.1} parent=1 // pred_fallthru
      _
    // Predicated region
    $region102: #{process_mapping_gnn_forward.1} parent=1 // pred_check
      _
    $region103: #{process_mapping_gnn_forward.1} parent=1 // pred_check_branch
      %203 = sbr.rel (0) target = $region105
    $region104: #{process_mapping_gnn_forward.1} parent=1 // pred_region
      %205 = dma.done [#allocation15], 16
    $region105: #{process_mapping_gnn_forward.1} parent=1 // pred_fallthru
      _
    // Predicated region
    $region106: #{process_mapping_gnn_forward.1} parent=1 // pred_check
      _
    $region107: #{process_mapping_gnn_forward.1} parent=1 // pred_check_branch
      %207 = sbr.rel (0) target = $region109
    $region108: #{process_mapping_gnn_forward.1} parent=1 // pred_region
      %209 = dma.done [#allocation15], 512
    $region109: #{process_mapping_gnn_forward.1} parent=1 // pred_fallthru
      _
    // Predicated region
    $region110: #{process_mapping_gnn_forward.1} parent=1 // pred_check
      _
    $region111: #{process_mapping_gnn_forward.1} parent=1 // pred_check_branch
      %211 = sbr.rel (0) target = $region113
    $region112: #{process_mapping_gnn_forward.1} parent=1 // pred_region
      %213 = dma.done [#allocation18], 16
    $region113: #{process_mapping_gnn_forward.1} parent=1 // pred_fallthru
      _
    %v214 = vlaneseq
    %v215 = vand.u32 %v214, 127
    %v216 = vld [vmem:[%s0] sm:$0xff]
    %v217 = vld [vmem:[%s0 + $0x8] sm:$0xf]
    %218 = vset.pattern.permute.xlu0 0
    %219 = vperm.xlu0 %218, %v216
    %v220 = vpop.permute.xlu0 %219
    %221 = vset.pattern.permute.xlu0 0
    %222 = vperm.xlu0 %221, %v217
    %v223 = vpop.permute.xlu0 %222
    %vm224 = vcmp.eq.s32.totalorder %v220, %v215
    %vm225 = vcmp.eq.s32.totalorder %v223, %v215
    %v226 = vsel %vm224, 1, 0
    %v227 = vsel %vm225, 1, 0
    %v228 = vcvt.s32.f32 %v226
    %v229 = vcvt.s32.f32 %v227
    %v230 = vld [vmem:[%s1] sm:$0xff]
    %v231 = vld [vmem:[%s1 + $0x8] sm:$0xf]
    %232 = vset.pattern.permute.xlu0 0
    %233 = vperm.xlu0 %232, %v230
    %v234 = vpop.permute.xlu0 %233
    %235 = vset.pattern.permute.xlu0 0
    %236 = vperm.xlu0 %235, %v231
    %v237 = vpop.permute.xlu0 %236
    %vm238 = vcmp.eq.s32.totalorder %v234, %v215
    %vm239 = vcmp.eq.s32.totalorder %v237, %v215
    %v240 = vsel %vm238, 1, 0
    %v241 = vsel %vm239, 1, 0
    %v242 = vcvt.s32.f32 %v240
    %v243 = vcvt.s32.f32 %v241
    %244 = vxpose.xlu0.b32.start [1/16] %v242, 128
    %245 = vxpose.xlu0.b32.cont [2/16] %v243, 128
    %246 = vxpose.xlu0.b32.cont [3/16] 0.0, 128
    %247 = vxpose.xlu0.b32.cont [4/16] 0.0, 128
    %248 = vxpose.xlu0.b32.cont [5/16] 0.0, 128
    %249 = vxpose.xlu0.b32.cont [6/16] 0.0, 128
    %250 = vxpose.xlu0.b32.cont [7/16] 0.0, 128
    %251 = vxpose.xlu0.b32.cont [8/16] 0.0, 128
    %252 = vxpose.xlu0.b32.cont [9/16] 0.0, 128
    %253 = vxpose.xlu0.b32.cont [10/16] 0.0, 128
    %254 = vxpose.xlu0.b32.cont [11/16] 0.0, 128
    %255 = vxpose.xlu0.b32.cont [12/16] 0.0, 128
    %256 = vxpose.xlu0.b32.cont [13/16] 0.0, 128
    %257 = vxpose.xlu0.b32.cont [14/16] 0.0, 128
    %258 = vxpose.xlu0.b32.cont [15/16] 0.0, 128
    %259 = vxpose.xlu0.b32.end [16/16] 0.0, 128
    %v260 = vpop.trf.xlu0
    %v261 = vpop.trf.xlu0
    %v262 = vpop.trf.xlu0
    %v263 = vpop.trf.xlu0
    %v264 = vpop.trf.xlu0
    %v265 = vpop.trf.xlu0
    %v266 = vpop.trf.xlu0
    %v267 = vpop.trf.xlu0
    %v268 = vpop.trf.xlu0
    %v269 = vpop.trf.xlu0
    %v270 = vpop.trf.xlu0
    %v271 = vpop.trf.xlu0
    %v272 = vpop.trf.xlu0
    %v273 = vpop.trf.xlu0
    %v274 = vpop.trf.xlu0
    %v275 = vpop.trf.xlu0
    %vm276 = vcmask 97280
    %v278 = vsel %vm276, %v260, 0
    %vm280 = vcmask 1043456
    %v282 = vsel %vm280, %v229, 0
    %284 = vmatpush.msra.mxu0 0.0
    %285 = vmatpush.msra.mxu0 0.0
    %286 = vmatpush.msra.mxu0 0.0
    %287 = vmatpush.msra.mxu0 0.0
    %288 = vmatpush.msra.mxu0 0.0
    %289 = vmatpush.msra.mxu0 0.0
    %290 = vmatpush.msra.mxu0 0.0
    %291 = vmatpush.msra.mxu0 0.0
    %292 = vmatpush.msra.mxu0 0.0
    %293 = vmatpush.msra.mxu0 0.0
    %294 = vmatpush.msra.mxu0 0.0
    %295 = vmatpush.msra.mxu0 0.0
    %296 = vmatpush.msra.mxu0 0.0
    %297 = vmatpush.msra.mxu0 0.0
    %298 = vmatpush.msra.mxu0 %v282
    %299 = vmatpush.msra.mxu0 %v228
    %300 = vmatmul.f32.gmra.mxu0 %v278
    %v301 = vpop.f32.mrf.mxu0
    %v302 = vadd.f32 0.0, %v301
    %303 = vdwg.mxu0
    %v304 = vlaneseq
    %v305 = vshrl.u32 %v304, 7
    %vm306 = vcmp.eq.s32.totalorder %v305, %v215
    %v307 = vsel %vm306, 1.0, %v302
    %v308 = vld [vmem:[%s2] sm:$0xff]
    %v309 = vld [vmem:[#allocation2] sm:$0xff]
    %v310 = vld [vmem:[#allocation2 + $0x8] sm:$0xff]
    %v311 = vld [vmem:[#allocation5] sm:$0x1]
    %v313 = vperm.slane %v311, 0
    %vm315 = vcmask 130048
    %v317 = vsel %vm315, %v308, 0
    %319 = vmatpush.msra.mxu0 0.0
    %320 = vmatpush.msra.mxu0 0.0
    %321 = vmatpush.msra.mxu0 0.0
    %322 = vmatpush.msra.mxu0 0.0
    %323 = vmatpush.msra.mxu0 0.0
    %324 = vmatpush.msra.mxu0 0.0
    %325 = vmatpush.msra.mxu0 0.0
    %326 = vmatpush.msra.mxu0 0.0
    %327 = vmatpush.msra.mxu0 0.0
    %328 = vmatpush.msra.mxu0 0.0
    %329 = vmatpush.msra.mxu0 0.0
    %330 = vmatpush.msra.mxu0 0.0
    %331 = vmatpush.msra.mxu0 0.0
    %332 = vmatpush.msra.mxu0 0.0
    %333 = vmatpush.msra.mxu0 %v310
    %334 = vmatpush.msra.mxu0 %v309
    %335 = vmatmul.f32.gmra.mxu0 %v317
    %v336 = vpop.f32.mrf.mxu0
    %v337 = vadd.f32 %v313, %v336
    %338 = vdwg.mxu0
    %v339 = vmax.f32 %v337, 0.0
    %v340 = vld [vmem:[#allocation7] sm:$0xff]
    %v341 = vld [vmem:[#allocation7 + $0x8] sm:$0xff]
    %v342 = vld [vmem:[#allocation7 + $0x10] sm:$0xff]
    %v343 = vld [vmem:[#allocation7 + $0x18] sm:$0xff]
    %vm344 = vcmask 261120
    %v346 = vsel %vm344, %v339, 0
    %348 = vmatpush.msra.mxu0 0.0
    %349 = vmatpush.msra.mxu0 0.0
    %350 = vmatpush.msra.mxu0 0.0
    %351 = vmatpush.msra.mxu0 0.0
    %352 = vmatpush.msra.mxu0 0.0
    %353 = vmatpush.msra.mxu0 0.0
    %354 = vmatpush.msra.mxu0 0.0
    %355 = vmatpush.msra.mxu0 0.0
    %356 = vmatpush.msra.mxu0 0.0
    %357 = vmatpush.msra.mxu0 0.0
    %358 = vmatpush.msra.mxu0 0.0
    %359 = vmatpush.msra.mxu0 0.0
    %360 = vmatpush.msra.mxu0 %v343
    %361 = vmatpush.msra.mxu0 %v342
    %362 = vmatpush.msra.mxu0 %v341
    %363 = vmatpush.msra.mxu0 %v340
    %364 = vmatmul.f32.gmra.mxu0 %v346
    %v365 = vpop.f32.mrf.mxu0
    %v366 = vadd.f32 0.0, %v365
    %367 = vdwg.mxu0
    %v368 = vld [vmem:[#allocation8] sm:$0x1]
    %v370 = vperm.slane %v368, 0
    %v372 = vmul.f32 %v366, %v370
    %v373 = vsel %vm344, %v372, 0.0
    %374 = vadd.xlane.f32.xlu0 %v373
    %v375 = vpop.xlane.xlu0 %374
    %v376 = vld [vmem:[%s6] sm:$0x1]
    %v378 = vsel %vm344, %v376, 0
    %v381 = vsel %vm344, %v366, 0
    %383 = vmatpush.xpose.msra.mxu0 0.0
    %384 = vmatpush.xpose.msra.mxu0 0.0
    %385 = vmatpush.xpose.msra.mxu0 0.0
    %386 = vmatpush.xpose.msra.mxu0 0.0
    %387 = vmatpush.xpose.msra.mxu0 0.0
    %388 = vmatpush.xpose.msra.mxu0 0.0
    %389 = vmatpush.xpose.msra.mxu0 0.0
    %390 = vmatpush.xpose.msra.mxu0 0.0
    %391 = vmatpush.xpose.msra.mxu0 0.0
    %392 = vmatpush.xpose.msra.mxu0 0.0
    %393 = vmatpush.xpose.msra.mxu0 0.0
    %394 = vmatpush.xpose.msra.mxu0 0.0
    %395 = vmatpush.xpose.msra.mxu0 0.0
    %396 = vmatpush.xpose.msra.mxu0 0.0
    %397 = vmatpush.xpose.msra.mxu0 0.0
    %398 = vmatpush.xpose.msra.mxu0 %v381
    %399 = vmatmul.f32.gmra.mxu0 %v378
    %v400 = vpop.f32.mrf.mxu0
    %v401 = vadd.f32 0.0, %v400
    %402 = vdwg.mxu0
    %v403 = vperm.slane %v401, 0
    %v404 = vadd.f32 %v375, %v403
    %vm405 = vcmp.gt.f32.partialorder %v404, 0.0
    %v406 = vmul.f32 %v404, 0.2
    %v407 = vsel %vm405, %v404, %v406
    %vm408 = vcmp.gt.f32.partialorder %v307, 0.0
    %v409 = vsel %vm408, %v407, -1e+30
    %vm410 = vcmask 64512
    %v411 = vsel %vm410, %v409, -inf
    %412 = vmax.xlane.f32.xlu0 %v411
    %v413 = vpop.xlane.xlu0 %412
    %v414 = vsub.f32 %v409, %v413
    %v415 = vmul.f32 %v414, 1.442695
    %v416 = vpow.pop %v415
    %v417 = vmul.f32 %v416, %v307
    %v418 = vsel %vm410, %v417, 0.0
    %419 = vadd.xlane.f32.xlu0 %v418
    %v420 = vpop.xlane.xlu0 %419
    %v421 = vrcp.pop %v420
    %v422 = vmul.f32 %v417, %v421
    %v423 = vld [vmem:[%s8] sm:$0x1]
    %v425 = vperm.slane %v423, 0
    %v428 = vsel %vm410, %v422, 0
    %430 = vmatpush.msra.mxu0 0.0
    %431 = vmatpush.msra.mxu0 0.0
    %432 = vmatpush.msra.mxu0 0.0
    %433 = vmatpush.msra.mxu0 0.0
    %434 = vmatpush.msra.mxu0 0.0
    %435 = vmatpush.msra.mxu0 0.0
    %436 = vmatpush.msra.mxu0 0.0
    %437 = vmatpush.msra.mxu0 0.0
    %438 = vmatpush.msra.mxu0 0.0
    %439 = vmatpush.msra.mxu0 0.0
    %440 = vmatpush.msra.mxu0 0.0
    %441 = vmatpush.msra.mxu0 0.0
    %442 = vmatpush.msra.mxu0 0.0
    %443 = vmatpush.msra.mxu0 0.0
    %444 = vmatpush.msra.mxu0 0.0
    %445 = vmatpush.msra.mxu0 %v366
    %446 = vmatmul.f32.gmra.mxu0 %v428
    %v447 = vpop.f32.mrf.mxu0
    %v448 = vadd.f32 %v425, %v447
    %449 = vdwg.mxu0
    %v450 = vadd.f32 %v339, %v448
    %v451 = vmax.f32 %v450, 0.0
    %s452 = scalar_lea.vmem [#allocation7], 32
    %v453 = vld [vmem:[%s452] sm:$0xff]
    %v454 = vld [vmem:[%s452 + $0x8] sm:$0xff]
    %v455 = vld [vmem:[%s452 + $0x10] sm:$0xff]
    %v456 = vld [vmem:[%s452 + $0x18] sm:$0xff]
    %v458 = vsel %vm344, %v451, 0
    %460 = vmatpush.msra.mxu0 0.0
    %461 = vmatpush.msra.mxu0 0.0
    %462 = vmatpush.msra.mxu0 0.0
    %463 = vmatpush.msra.mxu0 0.0
    %464 = vmatpush.msra.mxu0 0.0
    %465 = vmatpush.msra.mxu0 0.0
    %466 = vmatpush.msra.mxu0 0.0
    %467 = vmatpush.msra.mxu0 0.0
    %468 = vmatpush.msra.mxu0 0.0
    %469 = vmatpush.msra.mxu0 0.0
    %470 = vmatpush.msra.mxu0 0.0
    %471 = vmatpush.msra.mxu0 0.0
    %472 = vmatpush.msra.mxu0 %v456
    %473 = vmatpush.msra.mxu0 %v455
    %474 = vmatpush.msra.mxu0 %v454
    %475 = vmatpush.msra.mxu0 %v453
    %476 = vmatmul.f32.gmra.mxu0 %v458
    %v477 = vpop.f32.mrf.mxu0
    %v478 = vadd.f32 0.0, %v477
    %479 = vdwg.mxu0
    %s480 = scalar_lea.vmem [#allocation8], 1
    %v481 = vld [vmem:[%s480] sm:$0x1]
    %v483 = vperm.slane %v481, 0
    %v485 = vmul.f32 %v478, %v483
    %v486 = vsel %vm344, %v485, 0.0
    %487 = vadd.xlane.f32.xlu0 %v486
    %v488 = vpop.xlane.xlu0 %487
    %s489 = scalar_lea.vmem %s6, 1
    %v490 = vld [vmem:[%s489] sm:$0x1]
    %v492 = vsel %vm344, %v490, 0
    %v495 = vsel %vm344, %v478, 0
    %497 = vmatpush.xpose.msra.mxu0 0.0
    %498 = vmatpush.xpose.msra.mxu0 0.0
    %499 = vmatpush.xpose.msra.mxu0 0.0
    %500 = vmatpush.xpose.msra.mxu0 0.0
    %501 = vmatpush.xpose.msra.mxu0 0.0
    %502 = vmatpush.xpose.msra.mxu0 0.0
    %503 = vmatpush.xpose.msra.mxu0 0.0
    %504 = vmatpush.xpose.msra.mxu0 0.0
    %505 = vmatpush.xpose.msra.mxu0 0.0
    %506 = vmatpush.xpose.msra.mxu0 0.0
    %507 = vmatpush.xpose.msra.mxu0 0.0
    %508 = vmatpush.xpose.msra.mxu0 0.0
    %509 = vmatpush.xpose.msra.mxu0 0.0
    %510 = vmatpush.xpose.msra.mxu0 0.0
    %511 = vmatpush.xpose.msra.mxu0 0.0
    %512 = vmatpush.xpose.msra.mxu0 %v495
    %513 = vmatmul.f32.gmra.mxu0 %v492
    %v514 = vpop.f32.mrf.mxu0
    %v515 = vadd.f32 0.0, %v514
    %516 = vdwg.mxu0
    %v517 = vperm.slane %v515, 0
    %v518 = vadd.f32 %v488, %v517
    %vm519 = vcmp.gt.f32.partialorder %v518, 0.0
    %v520 = vmul.f32 %v518, 0.2
    %v521 = vsel %vm519, %v518, %v520
    %v522 = vsel %vm408, %v521, -1e+30
    %v523 = vsel %vm410, %v522, -inf
    %524 = vmax.xlane.f32.xlu0 %v523
    %v525 = vpop.xlane.xlu0 %524
    %v526 = vsub.f32 %v522, %v525
    %v527 = vmul.f32 %v526, 1.442695
    %v528 = vpow.pop %v527
    %v529 = vmul.f32 %v528, %v307
    %v530 = vsel %vm410, %v529, 0.0
    %531 = vadd.xlane.f32.xlu0 %v530
    %v532 = vpop.xlane.xlu0 %531
    %v533 = vrcp.pop %v532
    %v534 = vmul.f32 %v529, %v533
    %s535 = scalar_lea.vmem %s8, 1
    %v536 = vld [vmem:[%s535] sm:$0x1]
    %v538 = vperm.slane %v536, 0
    %v541 = vsel %vm410, %v534, 0
    %543 = vmatpush.msra.mxu0 0.0
    %544 = vmatpush.msra.mxu0 0.0
    %545 = vmatpush.msra.mxu0 0.0
    %546 = vmatpush.msra.mxu0 0.0
    %547 = vmatpush.msra.mxu0 0.0
    %548 = vmatpush.msra.mxu0 0.0
    %549 = vmatpush.msra.mxu0 0.0
    %550 = vmatpush.msra.mxu0 0.0
    %551 = vmatpush.msra.mxu0 0.0
    %552 = vmatpush.msra.mxu0 0.0
    %553 = vmatpush.msra.mxu0 0.0
    %554 = vmatpush.msra.mxu0 0.0
    %555 = vmatpush.msra.mxu0 0.0
    %556 = vmatpush.msra.mxu0 0.0
    %557 = vmatpush.msra.mxu0 0.0
    %558 = vmatpush.msra.mxu0 %v478
    %559 = vmatmul.f32.gmra.mxu0 %v541
    %v560 = vpop.f32.mrf.mxu0
    %v561 = vadd.f32 %v538, %v560
    %562 = vdwg.mxu0
    %v563 = vadd.f32 %v451, %v561
    %v564 = vmax.f32 %v563, 0.0
    %s565 = scalar_lea.vmem [#allocation7], 64
    %v566 = vld [vmem:[%s565] sm:$0xff]
    %v567 = vld [vmem:[%s565 + $0x8] sm:$0xff]
    %v568 = vld [vmem:[%s565 + $0x10] sm:$0xff]
    %v569 = vld [vmem:[%s565 + $0x18] sm:$0xff]
    %v571 = vsel %vm344, %v564, 0
    %573 = vmatpush.msra.mxu0 0.0
    %574 = vmatpush.msra.mxu0 0.0
    %575 = vmatpush.msra.mxu0 0.0
    %576 = vmatpush.msra.mxu0 0.0
    %577 = vmatpush.msra.mxu0 0.0
    %578 = vmatpush.msra.mxu0 0.0
    %579 = vmatpush.msra.mxu0 0.0
    %580 = vmatpush.msra.mxu0 0.0
    %581 = vmatpush.msra.mxu0 0.0
    %582 = vmatpush.msra.mxu0 0.0
    %583 = vmatpush.msra.mxu0 0.0
    %584 = vmatpush.msra.mxu0 0.0
    %585 = vmatpush.msra.mxu0 %v569
    %586 = vmatpush.msra.mxu0 %v568
    %587 = vmatpush.msra.mxu0 %v567
    %588 = vmatpush.msra.mxu0 %v566
    %589 = vmatmul.f32.gmra.mxu0 %v571
    %v590 = vpop.f32.mrf.mxu0
    %v591 = vadd.f32 0.0, %v590
    %592 = vdwg.mxu0
    %s593 = scalar_lea.vmem [#allocation8], 2
    %v594 = vld [vmem:[%s593] sm:$0x1]
    %v596 = vperm.slane %v594, 0
    %v598 = vmul.f32 %v591, %v596
    %v599 = vsel %vm344, %v598, 0.0
    %600 = vadd.xlane.f32.xlu0 %v599
    %v601 = vpop.xlane.xlu0 %600
    %s602 = scalar_lea.vmem %s6, 2
    %v603 = vld [vmem:[%s602] sm:$0x1]
    %v605 = vsel %vm344, %v603, 0
    %v608 = vsel %vm344, %v591, 0
    %610 = vmatpush.xpose.msra.mxu0 0.0
    %611 = vmatpush.xpose.msra.mxu0 0.0
    %612 = vmatpush.xpose.msra.mxu0 0.0
    %613 = vmatpush.xpose.msra.mxu0 0.0
    %614 = vmatpush.xpose.msra.mxu0 0.0
    %615 = vmatpush.xpose.msra.mxu0 0.0
    %616 = vmatpush.xpose.msra.mxu0 0.0
    %617 = vmatpush.xpose.msra.mxu0 0.0
    %618 = vmatpush.xpose.msra.mxu0 0.0
    %619 = vmatpush.xpose.msra.mxu0 0.0
    %620 = vmatpush.xpose.msra.mxu0 0.0
    %621 = vmatpush.xpose.msra.mxu0 0.0
    %622 = vmatpush.xpose.msra.mxu0 0.0
    %623 = vmatpush.xpose.msra.mxu0 0.0
    %624 = vmatpush.xpose.msra.mxu0 0.0
    %625 = vmatpush.xpose.msra.mxu0 %v608
    %626 = vmatmul.f32.gmra.mxu0 %v605
    %v627 = vpop.f32.mrf.mxu0
    %v628 = vadd.f32 0.0, %v627
    %629 = vdwg.mxu0
    %v630 = vperm.slane %v628, 0
    %v631 = vadd.f32 %v601, %v630
    %vm632 = vcmp.gt.f32.partialorder %v631, 0.0
    %v633 = vmul.f32 %v631, 0.2
    %v634 = vsel %vm632, %v631, %v633
    %v635 = vsel %vm408, %v634, -1e+30
    %v636 = vsel %vm410, %v635, -inf
    %637 = vmax.xlane.f32.xlu0 %v636
    %v638 = vpop.xlane.xlu0 %637
    %v639 = vsub.f32 %v635, %v638
    %v640 = vmul.f32 %v639, 1.442695
    %v641 = vpow.pop %v640
    %v642 = vmul.f32 %v641, %v307
    %v643 = vsel %vm410, %v642, 0.0
    %644 = vadd.xlane.f32.xlu0 %v643
    %v645 = vpop.xlane.xlu0 %644
    %v646 = vrcp.pop %v645
    %v647 = vmul.f32 %v642, %v646
    %s648 = scalar_lea.vmem %s8, 2
    %v649 = vld [vmem:[%s648] sm:$0x1]
    %v651 = vperm.slane %v649, 0
    %v654 = vsel %vm410, %v647, 0
    %656 = vmatpush.msra.mxu0 0.0
    %657 = vmatpush.msra.mxu0 0.0
    %658 = vmatpush.msra.mxu0 0.0
    %659 = vmatpush.msra.mxu0 0.0
    %660 = vmatpush.msra.mxu0 0.0
    %661 = vmatpush.msra.mxu0 0.0
    %662 = vmatpush.msra.mxu0 0.0
    %663 = vmatpush.msra.mxu0 0.0
    %664 = vmatpush.msra.mxu0 0.0
    %665 = vmatpush.msra.mxu0 0.0
    %666 = vmatpush.msra.mxu0 0.0
    %667 = vmatpush.msra.mxu0 0.0
    %668 = vmatpush.msra.mxu0 0.0
    %669 = vmatpush.msra.mxu0 0.0
    %670 = vmatpush.msra.mxu0 0.0
    %671 = vmatpush.msra.mxu0 %v591
    %672 = vmatmul.f32.gmra.mxu0 %v654
    %v673 = vpop.f32.mrf.mxu0
    %v674 = vadd.f32 %v651, %v673
    %675 = vdwg.mxu0
    %v676 = vadd.f32 %v564, %v674
    %v677 = vmax.f32 %v676, 0.0
    %v678 = vld [vmem:[%s9] sm:$0xff]
    %v679 = vld [vmem:[%s9 + $0x8] sm:$0xff]
    %v680 = vld [vmem:[%s9 + $0x10] sm:$0xff]
    %v681 = vld [vmem:[%s9 + $0x18] sm:$0xff]
    %v682 = vld [vmem:[%s10] sm:$0x1]
    %v684 = vperm.slane %v682, 0
    %v687 = vsel %vm344, %v677, 0
    %689 = vmatpush.msra.mxu0 0.0
    %690 = vmatpush.msra.mxu0 0.0
    %691 = vmatpush.msra.mxu0 0.0
    %692 = vmatpush.msra.mxu0 0.0
    %693 = vmatpush.msra.mxu0 0.0
    %694 = vmatpush.msra.mxu0 0.0
    %695 = vmatpush.msra.mxu0 0.0
    %696 = vmatpush.msra.mxu0 0.0
    %697 = vmatpush.msra.mxu0 0.0
    %698 = vmatpush.msra.mxu0 0.0
    %699 = vmatpush.msra.mxu0 0.0
    %700 = vmatpush.msra.mxu0 0.0
    %701 = vmatpush.msra.mxu0 %v681
    %702 = vmatpush.msra.mxu0 %v680
    %703 = vmatpush.msra.mxu0 %v679
    %704 = vmatpush.msra.mxu0 %v678
    %705 = vmatmul.f32.gmra.mxu0 %v687
    %v706 = vpop.f32.mrf.mxu0
    %v707 = vadd.f32 %v684, %v706
    %708 = vdwg.mxu0
    %v709 = vmax.f32 %v707, 0.0
    %v710 = vld [vmem:[#allocation10] sm:$0xff]
    %v711 = vld [vmem:[#allocation10 + $0x8] sm:$0xff]
    %v712 = vld [vmem:[#allocation10 + $0x10] sm:$0xff]
    %v713 = vld [vmem:[#allocation10 + $0x18] sm:$0xff]
    %v714 = vld [vmem:[%s12] sm:$0x1]
    %v716 = vperm.slane %v714, 0
    %v719 = vsel %vm344, %v709, 0
    %721 = vmatpush.msra.mxu0 0.0
    %722 = vmatpush.msra.mxu0 0.0
    %723 = vmatpush.msra.mxu0 0.0
    %724 = vmatpush.msra.mxu0 0.0
    %725 = vmatpush.msra.mxu0 0.0
    %726 = vmatpush.msra.mxu0 0.0
    %727 = vmatpush.msra.mxu0 0.0
    %728 = vmatpush.msra.mxu0 0.0
    %729 = vmatpush.msra.mxu0 0.0
    %730 = vmatpush.msra.mxu0 0.0
    %731 = vmatpush.msra.mxu0 0.0
    %732 = vmatpush.msra.mxu0 0.0
    %733 = vmatpush.msra.mxu0 %v713
    %734 = vmatpush.msra.mxu0 %v712
    %735 = vmatpush.msra.mxu0 %v711
    %736 = vmatpush.msra.mxu0 %v710
    %737 = vmatmul.f32.gmra.mxu0 %v719
    %v738 = vpop.f32.mrf.mxu0
    %v739 = vadd.f32 %v716, %v738
    %740 = vdwg.mxu0
    %741 = vst [vmem:[#allocation19] sm:$0xff] %v739
    %v742 = vsel %vm344, %v677, 0.0
    %v743 = vrot.slane %v742, 4
    %v744 = vadd.f32 %v742, %v743
    %v745 = vrot.slane %v744, 2
    %v746 = vadd.f32 %v744, %v745
    %v747 = vrot.slane %v746, 1
    %v748 = vadd.f32 %v746, %v747
    %v749 = vrcp.pop 8.0
    %v750 = vmul.f32 8.0, %v749
    %v751 = vsub.f32 1.0, %v750
    %v752 = vmul.f32 %v749, %v751
    %v753 = vadd.f32 %v749, %v752
    %vm754 = vweird.f32 %v749
    %v755 = vsel %vm754, %v749, %v753
    %v756 = vmul.f32 %v748, %v755
    %v757 = vsel %vm344, %v756, 0.0
    %758 = vst [vmem:[#allocation20] sm:$0x1] %v757
    %v759 = vld [vmem:[#allocation11] sm:$0xff]
    %v760 = vld [vmem:[#allocation11 + $0x8] sm:$0xff]
    %v761 = vld [vmem:[#allocation11 + $0x10] sm:$0xff]
    %v762 = vld [vmem:[#allocation11 + $0x18] sm:$0xff]
    %763 = vmatpush.msra.mxu0 0.0
    %764 = vmatpush.msra.mxu0 0.0
    %765 = vmatpush.msra.mxu0 0.0
    %766 = vmatpush.msra.mxu0 0.0
    %767 = vmatpush.msra.mxu0 0.0
    %768 = vmatpush.msra.mxu0 0.0
    %769 = vmatpush.msra.mxu0 0.0
    %770 = vmatpush.msra.mxu0 0.0
    %771 = vmatpush.msra.mxu0 0.0
    %772 = vmatpush.msra.mxu0 0.0
    %773 = vmatpush.msra.mxu0 0.0
    %774 = vmatpush.msra.mxu0 0.0
    %775 = vmatpush.msra.mxu0 %v762
    %776 = vmatpush.msra.mxu0 %v761
    %777 = vmatpush.msra.mxu0 %v760
    %778 = vmatpush.msra.mxu0 %v759
    %779 = vmatmul.f32.gmra.mxu0 %v687
    %v780 = vpop.f32.mrf.mxu0
    %v781 = vadd.f32 0.0, %v780
    %782 = vdwg.mxu0
    %v783 = vld [vmem:[#allocation13] sm:$0xff]
    %v784 = vld [vmem:[#allocation13 + $0x8] sm:$0xff]
    %v785 = vld [vmem:[#allocation13 + $0x10] sm:$0xff]
    %v786 = vld [vmem:[#allocation13 + $0x18] sm:$0xff]
    %787 = vmatpush.msra.mxu0 0.0
    %788 = vmatpush.msra.mxu0 0.0
    %789 = vmatpush.msra.mxu0 0.0
    %790 = vmatpush.msra.mxu0 0.0
    %791 = vmatpush.msra.mxu0 0.0
    %792 = vmatpush.msra.mxu0 0.0
    %793 = vmatpush.msra.mxu0 0.0
    %794 = vmatpush.msra.mxu0 0.0
    %795 = vmatpush.msra.mxu0 0.0
    %796 = vmatpush.msra.mxu0 0.0
    %797 = vmatpush.msra.mxu0 0.0
    %798 = vmatpush.msra.mxu0 0.0
    %799 = vmatpush.msra.mxu0 %v786
    %800 = vmatpush.msra.mxu0 %v785
    %801 = vmatpush.msra.mxu0 %v784
    %802 = vmatpush.msra.mxu0 %v783
    %803 = vmatmul.f32.gmra.mxu0 %v687
    %v804 = vpop.f32.mrf.mxu0
    %v805 = vadd.f32 0.0, %v804
    %806 = vdwg.mxu0
    %v808 = vsel %vm410, %v242, 0
    %v811 = vsel %vm410, %v243, 0
    %813 = vmatpush.msra.mxu0 0.0
    %814 = vmatpush.msra.mxu0 0.0
    %815 = vmatpush.msra.mxu0 0.0
    %816 = vmatpush.msra.mxu0 0.0
    %817 = vmatpush.msra.mxu0 0.0
    %818 = vmatpush.msra.mxu0 0.0
    %819 = vmatpush.msra.mxu0 0.0
    %820 = vmatpush.msra.mxu0 0.0
    %821 = vmatpush.msra.mxu0 0.0
    %822 = vmatpush.msra.mxu0 0.0
    %823 = vmatpush.msra.mxu0 0.0
    %824 = vmatpush.msra.mxu0 0.0
    %825 = vmatpush.msra.mxu0 0.0
    %826 = vmatpush.msra.mxu0 0.0
    %827 = vmatpush.msra.mxu0 0.0
    %828 = vmatpush.msra.mxu0 %v805
    %829 = vmatmul.f32.gmra.mxu0 %v808
    %v830 = vpop.f32.mrf.mxu0
    %v831 = vadd.f32 0.0, %v830
    %832 = vmatmul.f32.gmra.mxu0 %v811
    %v833 = vpop.f32.mrf.mxu0
    %v834 = vadd.f32 0.0, %v833
    %835 = vdwg.mxu0
    %v837 = vsel %vm410, %v228, 0
    %v839 = vsel %vm410, %v229, 0
    %841 = vmatpush.msra.mxu0 0.0
    %842 = vmatpush.msra.mxu0 0.0
    %843 = vmatpush.msra.mxu0 0.0
    %844 = vmatpush.msra.mxu0 0.0
    %845 = vmatpush.msra.mxu0 0.0
    %846 = vmatpush.msra.mxu0 0.0
    %847 = vmatpush.msra.mxu0 0.0
    %848 = vmatpush.msra.mxu0 0.0
    %849 = vmatpush.msra.mxu0 0.0
    %850 = vmatpush.msra.mxu0 0.0
    %851 = vmatpush.msra.mxu0 0.0
    %852 = vmatpush.msra.mxu0 0.0
    %853 = vmatpush.msra.mxu0 0.0
    %854 = vmatpush.msra.mxu0 0.0
    %855 = vmatpush.msra.mxu0 0.0
    %856 = vmatpush.msra.mxu0 %v781
    %857 = vmatmul.f32.gmra.mxu0 %v837
    %v858 = vpop.f32.mrf.mxu0
    %v859 = vadd.f32 %v831, %v858
    %860 = vmatmul.f32.gmra.mxu0 %v839
    %v861 = vpop.f32.mrf.mxu0
    %v862 = vadd.f32 %v834, %v861
    %863 = vdwg.mxu0
    %v864 = vld [vmem:[#allocation14] sm:$0x1]
    %v866 = vperm.slane %v864, 0
    %v868 = vadd.f32 %v859, %v866
    %v869 = vadd.f32 %v862, %v866
    %v870 = vmax.f32 %v868, 0.0
    %v871 = vmax.f32 %v869, 0.0
    %v872 = vld [vmem:[#allocation16] sm:$0xff]
    %v873 = vld [vmem:[#allocation16 + $0x8] sm:$0xff]
    %v874 = vld [vmem:[#allocation16 + $0x10] sm:$0xff]
    %v875 = vld [vmem:[#allocation16 + $0x18] sm:$0xff]
    %v876 = vld [vmem:[#allocation17] sm:$0x1]
    %v878 = vperm.slane %v876, 0
    %v881 = vsel %vm344, %v870, 0
    %v884 = vsel %vm344, %v871, 0
    %886 = vmatpush.msra.mxu0 0.0
    %887 = vmatpush.msra.mxu0 0.0
    %888 = vmatpush.msra.mxu0 0.0
    %889 = vmatpush.msra.mxu0 0.0
    %890 = vmatpush.msra.mxu0 0.0
    %891 = vmatpush.msra.mxu0 0.0
    %892 = vmatpush.msra.mxu0 0.0
    %893 = vmatpush.msra.mxu0 0.0
    %894 = vmatpush.msra.mxu0 0.0
    %895 = vmatpush.msra.mxu0 0.0
    %896 = vmatpush.msra.mxu0 0.0
    %897 = vmatpush.msra.mxu0 0.0
    %898 = vmatpush.msra.mxu0 %v875
    %899 = vmatpush.msra.mxu0 %v874
    %900 = vmatpush.msra.mxu0 %v873
    %901 = vmatpush.msra.mxu0 %v872
    %902 = vmatmul.f32.gmra.mxu0 %v881
    %v903 = vpop.f32.mrf.mxu0
    %v904 = vadd.f32 %v878, %v903
    %905 = vmatmul.f32.gmra.mxu0 %v884
    %v906 = vpop.f32.mrf.mxu0
    %v907 = vadd.f32 %v878, %v906
    %908 = vdwg.mxu0
    %909 = vst [vmem:[%s19] sm:$0xff] %v904
    %910 = vst [vmem:[%s19 + $0x8] sm:$0xf] %v907
    // Predicated region
    $region114: #{process_mapping_gnn_forward.1} parent=1 // pred_check
      _
    $region115: #{process_mapping_gnn_forward.1} parent=1 // pred_check_branch
      %912 = sbr.rel (0) target = $region117
    $region116: #{process_mapping_gnn_forward.1} parent=1 // pred_region
      %914 = vsyncadd [#allocation4], 0
      %s916 = sshll.u32 [#allocation19], 4
      %s917 = int_to_ptr.vmem [resolvable:$true] %s916
      %s918 = sshll.u32 %s18, 4
      %s919 = int_to_ptr.hbm [resolvable:$true] %s918
      %921 = dma.vmem_to_hbm [thread:$0]  %s917, 128, %s919, [#allocation4]
    $region117: #{process_mapping_gnn_forward.1} parent=1 // pred_fallthru
      _
    // Predicated region
    $region118: #{process_mapping_gnn_forward.1} parent=1 // pred_check
      _
    $region119: #{process_mapping_gnn_forward.1} parent=1 // pred_check_branch
      %923 = sbr.rel (0) target = $region121
    $region120: #{process_mapping_gnn_forward.1} parent=1 // pred_region
      _
    $region121: #{process_mapping_gnn_forward.1} parent=1 // pred_fallthru
      _
    // Predicated region
    $region122: #{process_mapping_gnn_forward.1} parent=1 // pred_check
      _
    $region123: #{process_mapping_gnn_forward.1} parent=1 // pred_check_branch
      %925 = sbr.rel (0) target = $region125
    $region124: #{process_mapping_gnn_forward.1} parent=1 // pred_region
      %927 = vsyncadd [#allocation21], 0
      %s929 = sshll.u32 [#allocation20], 4
      %s930 = int_to_ptr.vmem [resolvable:$true] %s929
      %s931 = sshll.u32 %s20, 4
      %s932 = int_to_ptr.hbm [resolvable:$true] %s931
      %934 = dma.vmem_to_hbm [thread:$0]  %s930, 16, %s932, [#allocation21]
    $region125: #{process_mapping_gnn_forward.1} parent=1 // pred_fallthru
      _
    // Predicated region
    $region126: #{process_mapping_gnn_forward.1} parent=1 // pred_check
      _
    $region127: #{process_mapping_gnn_forward.1} parent=1 // pred_check_branch
      %936 = sbr.rel (0) target = $region129
    $region128: #{process_mapping_gnn_forward.1} parent=1 // pred_region
      %938 = dma.done [#allocation4], 128
    $region129: #{process_mapping_gnn_forward.1} parent=1 // pred_fallthru
      _
    // Predicated region
    $region130: #{process_mapping_gnn_forward.1} parent=1 // pred_check
      _
    $region131: #{process_mapping_gnn_forward.1} parent=1 // pred_check_branch
      %940 = sbr.rel (0) target = $region133
    $region132: #{process_mapping_gnn_forward.1} parent=1 // pred_region
      _
    $region133: #{process_mapping_gnn_forward.1} parent=1 // pred_fallthru
      _
    // Predicated region
    $region134: #{process_mapping_gnn_forward.1} parent=1 // pred_check
      _
    $region135: #{process_mapping_gnn_forward.1} parent=1 // pred_check_branch
      %942 = sbr.rel (0) target = $region137
    $region136: #{process_mapping_gnn_forward.1} parent=1 // pred_region
      %944 = dma.done [#allocation21], 16
    $region137: #{process_mapping_gnn_forward.1} parent=1 // pred_fallthru
      _
    %945 = vsyncpa [#allocation3], 1
    %946 = vsyncpa [#allocation6], 1
    %947 = vsyncpa [#allocation9], 1
    %948 = vsyncpa [#allocation12], 1
    %949 = vsyncpa [#allocation15], 1
    %950 = vsyncpa [#allocation18], 1
    %951 = vsyncpa [#allocation4], 1
    %952 = vsyncpa [#allocation21], 1

</llo_original>
